<compile_context>
chip_gen: v5e
topology: v5e:2x2
jax: 0.10.0
libtpu: 0.0.40
codegen_flags: <defaults>
</compile_context>

<pallas_src>
import math
from functools import partial

import jax
import jax.numpy as jnp
from jax.experimental import pallas as pl
from jax.experimental.pallas import tpu as pltpu

EPS = 1e-4          # RMSNorm eps from the reference module
NEG_INF = -1e30


# ----------------------------- kernel helpers ------------------------------

def _rmsnorm(x, w):
    # x: (S, D), w: (1, D)  ->  x * (w / sqrt(mean(x^2, -1) + eps))
    inv_rms = jax.lax.rsqrt(jnp.mean(x * x, axis=-1, keepdims=True) + EPS)
    return x * (w * inv_rms)


def _stack_kernel(n_heads, d_head,
                  x_in_ref, pad_ref, cos_ref, sin_ref, rotp_ref,
                  attn_nw_ref, qkv_w_ref, out_w_ref,
                  ff_nw_ref, w1_w_ref, w1_b_ref, w2_w_ref, w2_b_ref,
                  y_ref):
    l = pl.program_id(1)
    S, D = cos_ref.shape

    @pl.when(l == 0)
    def _init():
        y_ref[0] = x_in_ref[0]          # seed the resident activation once per batch

    x = y_ref[0]                        # (S, D) f32, resident across the layer axis

    # ---- attention branch ----
    a = _rmsnorm(x, attn_nw_ref[0])
    qkv = jnp.dot(a.astype(jnp.bfloat16), qkv_w_ref[0],
                  preferred_element_type=jnp.float32)           # (S, 3D)
    q = qkv[:, 0 * D:1 * D]             # 1/sqrt(d_head) already folded into Wq
    k = qkv[:, 1 * D:2 * D]
    v = qkv[:, 2 * D:3 * D]

    cos = cos_ref[...]
    sin = sin_ref[...]
    rotp = rotp_ref[...]                # (D, D) bf16 +/-1 rotate_half permutation

    def rope(t):
        # interleaved RoPE: t*cos + rotate_half(t)*sin
        rot = jnp.dot(t.astype(jnp.bfloat16), rotp,
                      preferred_element_type=jnp.float32)
        return t * cos + rot * sin

    q = rope(q)
    k = rope(k)

    # reference SDPA bool mask: (~causal) | pad  (True == attend), rebuilt from
    # the (1, S) pad flags -- no (S, S) bias streamed from HBM.
    row = jax.lax.broadcasted_iota(jnp.int32, (S, S), 0)
    col = jax.lax.broadcasted_iota(jnp.int32, (S, S), 1)
    allowed = (col > row) | (pad_ref[0] > 0.5)
    bias = jnp.where(allowed, jnp.float32(0.0), jnp.float32(NEG_INF))

    qb = q.astype(jnp.bfloat16)
    kb = k.astype(jnp.bfloat16)
    vb = v.astype(jnp.bfloat16)
    wout = out_w_ref[0]                 # (D, D) bf16

    # per-head scores (d_head=16 -> never MXU-efficient; keep surrounding
    # overhead minimal: no masked partial stores, out-proj fused per head).
    for h in range(n_heads):
        sl = slice(h * d_head, (h + 1) * d_head)
        s = jax.lax.dot_general(qb[:, sl], kb[:, sl],
                                (((1,), (1,)), ((), ())),
                                preferred_element_type=jnp.float32)   # (S, S)
        s = s + bias
        m = jnp.max(s, axis=-1, keepdims=True)
        e = jnp.exp(s - m)
        p = e * pl.reciprocal(jnp.sum(e, axis=-1, keepdims=True), approx=True)
        o_h = jnp.dot(p.astype(jnp.bfloat16), vb[:, sl],
                      preferred_element_type=jnp.float32)             # (S, dh)
        x = x + jnp.dot(o_h.astype(jnp.bfloat16), wout[sl, :],
                        preferred_element_type=jnp.float32)           # (S, D)

    # ---- feed-forward branch (SwiGLU) ----
    f = _rmsnorm(x, ff_nw_ref[0])
    h12 = jnp.dot(f.astype(jnp.bfloat16), w1_w_ref[0],
                  preferred_element_type=jnp.float32) + w1_b_ref[0]
    hid = h12.shape[-1] // 2
    x1 = h12[:, :hid]
    x2 = h12[:, hid:]
    g = x1 * (1.0 / (1.0 + jnp.exp(-x1))) * x2       # silu(x1) * x2
    x = x + (jnp.dot(g.astype(jnp.bfloat16), w2_w_ref[0],
                     preferred_element_type=jnp.float32) + w2_b_ref[0])

    y_ref[0] = x


def _final_kernel(x_ref, lnf_w_ref, emb_ref, out_ref):
    xn = _rmsnorm(x_ref[...], lnf_w_ref[...])
    # tied lm_head: contract the D axis against the embedding rows directly
    # ((M, D) . (TV, D) -> (M, TV)); no emb.T materialization.
    out_ref[...] = jax.lax.dot_general(
        xn.astype(jnp.bfloat16), emb_ref[...],
        (((1,), (1,)), ((), ())), preferred_element_type=jnp.float32)


# ----------------------------- pallas wrappers ------------------------------

def _run_blocks(x, pad, cos, sin, rotp, w, n_heads, d_head):
    B, S, D = x.shape
    L = w["qkv_w"].shape[0]
    kernel = partial(_stack_kernel, n_heads, d_head)

    layer_arrays = [w["attn_norm_w"], w["qkv_w"], w["out_w"], w["ff_norm_w"],
                    w["w1_w"], w["w1_b"], w["w2_w"], w["w2_b"]]

    in_specs = ([pl.BlockSpec((1, S, D), lambda b, l: (b, 0, 0)),   # embeddings
                 pl.BlockSpec((1, 1, S), lambda b, l: (b, 0, 0)),   # pad flags
                 pl.BlockSpec((S, D), lambda b, l: (0, 0)),         # cos
                 pl.BlockSpec((S, D), lambda b, l: (0, 0)),         # sin
                 pl.BlockSpec((D, D), lambda b, l: (0, 0))]         # rotate_half P
                + [pl.BlockSpec((1,) + a.shape[1:], lambda b, l: (l, 0, 0))
                   for a in layer_arrays])                          # per-layer weights

    def nbytes(shape, dt):
        return int(math.prod(shape)) * jnp.dtype(dt).itemsize

    per_step = (2 * nbytes((S, D), jnp.float32)          # x input + resident output
                + nbytes((S,), jnp.float32)              # pad flags
                + 2 * nbytes((S, D), jnp.float32)        # rope tables
                + nbytes((D, D), jnp.bfloat16)           # rotate_half matrix
                + sum(nbytes(a.shape[1:], a.dtype) for a in layer_arrays))
    vmem_limit = max(2 * per_step + (16 << 20), 32 << 20)
    try:
        phys = pltpu.get_tpu_info().vmem_capacity_bytes
    except Exception:
        phys = 64 << 20                                  # v7x-safe fallback
    vmem_limit = min(vmem_limit, int(phys * 0.9))

    return pl.pallas_call(
        kernel,
        out_shape=jax.ShapeDtypeStruct((B, S, D), jnp.float32),
        grid_spec=pltpu.PrefetchScalarGridSpec(
            num_scalar_prefetch=0,
            grid=(B, L),                                  # layer axis innermost
            in_specs=in_specs,
            out_specs=pl.BlockSpec((1, S, D), lambda b, l: (b, 0, 0)),
        ),
        compiler_params=pltpu.CompilerParams(
            dimension_semantics=("parallel", "arbitrary"),
            vmem_limit_bytes=vmem_limit),
    )(x, pad, cos, sin, rotp, *layer_arrays)


def _run_final(x2d, lnf_w, emb_pad_bf16):
    M, D = x2d.shape
    Vp = emb_pad_bf16.shape[0]                 # already padded to a multiple of 128
    tv = 512 if Vp % 512 == 0 else (256 if Vp % 256 == 0 else 128)
    n_vt = Vp // tv
    # TODO(synk): tile M as well for large B*S; at demo scale M=B*S=32 fits.
    return pl.pallas_call(
        _final_kernel,
        out_shape=jax.ShapeDtypeStruct((M, Vp), jnp.float32),
        grid_spec=pltpu.PrefetchScalarGridSpec(
            num_scalar_prefetch=0,
            grid=(n_vt,),
            in_specs=[pl.BlockSpec((M, D), lambda vt: (0, 0)),
                      pl.BlockSpec((1, D), lambda vt: (0, 0)),
                      pl.BlockSpec((tv, D), lambda vt: (vt, 0))],
            out_specs=pl.BlockSpec((M, tv), lambda vt: (0, vt)),
        ),
        compiler_params=pltpu.CompilerParams(
            dimension_semantics=("parallel",),
            vmem_limit_bytes=32 << 20),
    )(x2d, lnf_w, emb_pad_bf16)


# ----------------------------- model glue -----------------------------------

def _rope_tables(S, d_head, n_heads):
    # rotary_embedding_torch defaults: theta=10000, interleaved-pair repeat.
    inv_freq = 1.0 / (10000.0 ** (jnp.arange(0, d_head, 2, dtype=jnp.float32) / d_head))
    freqs = jnp.outer(jnp.arange(S, dtype=jnp.float32), inv_freq)
    freqs = jnp.repeat(freqs, 2, axis=-1)                 # [f0,f0,f1,f1,...]
    cos = jnp.tile(jnp.cos(freqs), (1, n_heads))          # (S, D), head-major tiling
    sin = jnp.tile(jnp.sin(freqs), (1, n_heads))
    return cos.astype(jnp.float32), sin.astype(jnp.float32)


def _rotate_half_matrix(d):
    # rotate_half(x) = x @ P with P[2i+1,2i] = -1, P[2i,2i+1] = +1 (interleaved pairs)
    P = jnp.zeros((d, d), jnp.float32)
    idx = jnp.arange(0, d, 2)
    P = P.at[idx + 1, idx].set(-1.0)
    P = P.at[idx, idx + 1].set(1.0)
    return P


def _prep_weights(params, n_heads):
    """Stack per-layer weights into [L,...] arrays, reorder QKV columns from
    torch's [head][q,k,v][dh] layout to Q|K|V head-major, fold the SDPA
    1/sqrt(d_head) scale into the Q columns, cast GEMM weights to bf16."""
    blocks = params["blocks"]
    L = len(blocks)
    D = params["emb"].shape[1]
    dh = D // n_heads

    def stack(name):
        return jnp.stack([b[name] for b in blocks])

    qkv = stack("qkv_w").reshape(L, D, n_heads, 3, dh)
    wq = qkv[:, :, :, 0, :].reshape(L, D, D) * (1.0 / math.sqrt(dh))
    wk = qkv[:, :, :, 1, :].reshape(L, D, D)
    wv = qkv[:, :, :, 2, :].reshape(L, D, D)
    qkv3 = jnp.concatenate([wq, wk, wv], axis=-1)          # (L, D, 3D)

    bf16 = jnp.bfloat16
    return dict(
        attn_norm_w=stack("attn_norm_w"),
        qkv_w=qkv3.astype(bf16),
        out_w=stack("out_w").astype(bf16),
        ff_norm_w=stack("ff_norm_w"),
        w1_w=stack("w1_w").astype(bf16),
        w1_b=stack("w1_b"),
        w2_w=stack("w2_w").astype(bf16),
        w2_b=stack("w2_b"),
    )


def _xavier(key, shape_in_out):
    fan_in, fan_out = shape_in_out
    a = math.sqrt(6.0 / (fan_in + fan_out))
    return jax.random.uniform(key, shape_in_out, jnp.float32, minval=-a, maxval=a)


def init_params(key, vocab_size, dim, n_heads, num_layers, ff_dim):
    keys = jax.random.split(key, num_layers * 4 + 1)
    # nn.Embedding(padding_idx) zeroes the pad row, but _init_weights' xavier
    # then overwrites the whole table -> plain xavier matches the reference.
    emb = _xavier(keys[0], (vocab_size, dim))
    blocks = []
    for l in range(num_layers):
        k0, k1, k2, k3 = keys[1 + 4 * l: 5 + 4 * l]
        blocks.append(dict(
            attn_norm_w=jnp.ones((1, dim), jnp.float32),
            qkv_w=_xavier(k0, (dim, 3 * dim)),             # torch column layout [h][q,k,v][dh]
            out_w=_xavier(k1, (dim, dim)),
            ff_norm_w=jnp.ones((1, dim), jnp.float32),
            w1_w=_xavier(k2, (dim, 2 * ff_dim)),
            w1_b=jnp.zeros((1, 2 * ff_dim), jnp.float32),
            w2_w=_xavier(k3, (ff_dim, dim)),
            w2_b=jnp.zeros((1, dim), jnp.float32),
        ))
    return dict(emb=emb, blocks=blocks, ln_f_w=jnp.ones((1, dim), jnp.float32))


def modern_transformer_lm_forward(input_ids, params, pad_token_id, n_heads):
    B, S = input_ids.shape
    V, D = params["emb"].shape
    d_head = D // n_heads

    # TODO(synk): token-embedding row gather stays in XLA glue (no clean
    #             BlockSpec gather for data-dependent rows).
    x = params["emb"][input_ids].astype(jnp.float32)              # (B, S, D)
    pad = (input_ids == pad_token_id).astype(jnp.float32)[:, None, :]   # (B, 1, S)
    cos, sin = _rope_tables(S, d_head, n_heads)                    # (S, D) each
    rotp = _rotate_half_matrix(D).astype(jnp.bfloat16)             # (D, D), shared
    w = _prep_weights(params, n_heads)

    x = _run_blocks(x, pad, cos, sin, rotp, w, n_heads, d_head)

    # tied lm_head over a 128-padded vocab; batch folded into the GEMM M dim.
    Vp = 128 * ((V + 127) // 128)
    emb_p = params["emb"]
    if Vp != V:
        emb_p = jnp.pad(emb_p, ((0, Vp - V), (0, 0)))
    logits = _run_final(x.reshape(B * S, D), params["ln_f_w"],
                        emb_p.astype(jnp.bfloat16))
    logits = logits.reshape(B, S, Vp)[:, :, :V]
    return logits


# --------------------------------- main --------------------------------------

if __name__ == "__main__":
    vocab_size = 256
    pad_token_id = 0
    dim = 64
    n_heads = 4
    num_layers = 2
    ff_dim = 128

    B, S = 2, 16

    key = jax.random.PRNGKey(0)
    k_param, k_ids = jax.random.split(key)
    params = init_params(k_param, vocab_size, dim, n_heads, num_layers, ff_dim)

    input_ids = jax.random.randint(k_ids, (B, S), 1, vocab_size, dtype=jnp.int32)
    # pad the tail so every sequence has padding (avoids PyTorch's NaN fully-masked rows)
    input_ids = input_ids.at[:, -3:].set(pad_token_id)

    fwd = jax.jit(partial(modern_transformer_lm_forward,
                          pad_token_id=pad_token_id, n_heads=n_heads))
    logits = fwd(input_ids, params)
    logits = jax.block_until_ready(logits)

    assert logits.shape == (B, S, vocab_size), logits.shape
    assert bool(jnp.all(jnp.isfinite(logits)))
    print("KERNEL_OK")
</pallas_src>

<mosaic_0001>
module attributes {stable_mosaic.version = 11 : i64} {
  func.func @_final_kernel(%arg0: i32, %arg1: memref<32x64xf32, #tpu.memory_space<vmem>>, %arg2: memref<1x64xf32, #tpu.memory_space<vmem>>, %arg3: memref<256x64xbf16, #tpu.memory_space<vmem>>, %arg4: memref<32x256xf32, #tpu.memory_space<vmem>>) attributes {dimension_semantics = [#tpu.dimension_semantics<parallel>], iteration_bounds = array<i64: 1>, scalar_prefetch = 0 : i64, scratch_operands = 0 : i64, tpu.core_type = #tpu.core_type<tc>, window_params = [{pipeline_mode = #tpu.pipeline_mode<synchronous>, transform_indices = @transform_0, window_bounds = array<i64: 32, 64>}, {pipeline_mode = #tpu.pipeline_mode<synchronous>, transform_indices = @transform_1, window_bounds = array<i64: 1, 64>}, {transform_indices = @transform_2, window_bounds = array<i64: 256, 64>}, {transform_indices = @transform_3, window_bounds = array<i64: 32, 256>}]} {
    %c0 = arith.constant 0 : index
    %c0_0 = arith.constant 0 : index
    %0 = vector.load %arg1[%c0, %c0_0] : memref<32x64xf32, #tpu.memory_space<vmem>>, vector<32x64xf32>
    %c0_1 = arith.constant 0 : index
    %c0_2 = arith.constant 0 : index
    %1 = vector.load %arg2[%c0_1, %c0_2] : memref<1x64xf32, #tpu.memory_space<vmem>>, vector<1x64xf32>
    %2 = arith.mulf %0, %0 : vector<32x64xf32>
    %cst = arith.constant dense<0.000000e+00> : vector<32xf32>
    %3 = vector.multi_reduction <add>, %2, %cst [1] : vector<32x64xf32> to vector<32xf32>
    %4 = vector.shape_cast %3 : vector<32xf32> to vector<32x1xf32>
    %cst_3 = arith.constant 6.400000e+01 : f32
    %5 = vector.broadcast %cst_3 : f32 to vector<32x1xf32>
    %6 = arith.divf %4, %5 : vector<32x1xf32>
    %cst_4 = arith.constant 9.99999974E-5 : f32
    %7 = vector.broadcast %cst_4 : f32 to vector<32x1xf32>
    %8 = arith.addf %6, %7 : vector<32x1xf32>
    %9 = math.rsqrt %8 : vector<32x1xf32>
    %10 = vector.broadcast %1 : vector<1x64xf32> to vector<32x64xf32>
    %11 = vector.broadcast %9 : vector<32x1xf32> to vector<32x64xf32>
    %12 = arith.mulf %10, %11 : vector<32x64xf32>
    %13 = arith.mulf %0, %12 : vector<32x64xf32>
    %14 = arith.truncf %13 : vector<32x64xf32> to vector<32x64xbf16>
    %c0_5 = arith.constant 0 : index
    %c0_6 = arith.constant 0 : index
    %15 = vector.load %arg3[%c0_5, %c0_6] : memref<256x64xbf16, #tpu.memory_space<vmem>>, vector<256x64xbf16>
    %cst_7 = arith.constant dense<0.000000e+00> : vector<32x256xf32>
    %16 = tpu.matmul %14, %15, %cst_7 {dimension_numbers = #tpu.dot_dimension_numbers<[1], [1], [0], [0], [0, 0, 1, 0], [], []>} : vector<32x64xbf16>, vector<256x64xbf16>, vector<32x256xf32> -> vector<32x256xf32>
    %c0_8 = arith.constant 0 : index
    %c0_9 = arith.constant 0 : index
    %17 = vector.load %arg4[%c0_8, %c0_9] : memref<32x256xf32, #tpu.memory_space<vmem>>, vector<32x256xf32>
    tpu.vector_store %arg4[%c0_8, %c0_9], %16 {strides = array<i32>} : memref<32x256xf32, #tpu.memory_space<vmem>>, vector<32x256xf32>,
    return
  }
  func.func @transform_0(%arg0: i32) -> (i32, i32) {
    %c0_i32 = arith.constant 0 : i32
    %c0_i32_0 = arith.constant 0 : i32
    %c0_i32_1 = arith.constant 0 : i32
    return %c0_i32, %c0_i32_0 : i32, i32
  }
  func.func @transform_1(%arg0: i32) -> (i32, i32) {
    %c0_i32 = arith.constant 0 : i32
    %c0_i32_0 = arith.constant 0 : i32
    %c0_i32_1 = arith.constant 0 : i32
    return %c0_i32, %c0_i32_0 : i32, i32
  }
  func.func @transform_2(%arg0: i32) -> (i32, i32) {
    %c0_i32 = arith.constant 0 : i32
    %c0_i32_0 = arith.constant 0 : i32
    return %arg0, %c0_i32 : i32, i32
  }
  func.func @transform_3(%arg0: i32) -> (i32, i32) {
    %c0_i32 = arith.constant 0 : i32
    %c0_i32_0 = arith.constant 0 : i32
    return %c0_i32, %arg0 : i32, i32
  }
}

module attributes {stable_mosaic.version = 11 : i64} {
  func.func @_stack_kernel(%arg0: i32, %arg1: i32, %arg2: memref<1x16x64xf32, #tpu.memory_space<vmem>>, %arg3: memref<1x1x16xf32, #tpu.memory_space<vmem>>, %arg4: memref<16x64xf32, #tpu.memory_space<vmem>>, %arg5: memref<16x64xf32, #tpu.memory_space<vmem>>, %arg6: memref<64x64xbf16, #tpu.memory_space<vmem>>, %arg7: memref<1x1x64xf32, #tpu.memory_space<vmem>>, %arg8: memref<1x64x192xbf16, #tpu.memory_space<vmem>>, %arg9: memref<1x64x64xbf16, #tpu.memory_space<vmem>>, %arg10: memref<1x1x64xf32, #tpu.memory_space<vmem>>, %arg11: memref<1x64x256xbf16, #tpu.memory_space<vmem>>, %arg12: memref<1x1x256xf32, #tpu.memory_space<vmem>>, %arg13: memref<1x128x64xbf16, #tpu.memory_space<vmem>>, %arg14: memref<1x1x64xf32, #tpu.memory_space<vmem>>, %arg15: memref<1x16x64xf32, #tpu.memory_space<vmem>>) attributes {dimension_semantics = [#tpu.dimension_semantics<parallel>, #tpu.dimension_semantics<arbitrary>], iteration_bounds = array<i64: 2, 2>, scalar_prefetch = 0 : i64, scratch_operands = 0 : i64, tpu.core_type = #tpu.core_type<tc>, window_params = [{transform_indices = @transform_0, window_bounds = array<i64: 1, 16, 64>}, {transform_indices = @transform_1, window_bounds = array<i64: 1, 1, 16>}, {pipeline_mode = #tpu.pipeline_mode<synchronous>, transform_indices = @transform_2, window_bounds = array<i64: 16, 64>}, {pipeline_mode = #tpu.pipeline_mode<synchronous>, transform_indices = @transform_3, window_bounds = array<i64: 16, 64>}, {pipeline_mode = #tpu.pipeline_mode<synchronous>, transform_indices = @transform_4, window_bounds = array<i64: 64, 64>}, {transform_indices = @transform_5, window_bounds = array<i64: 1, 1, 64>}, {transform_indices = @transform_6, window_bounds = array<i64: 1, 64, 192>}, {transform_indices = @transform_7, window_bounds = array<i64: 1, 64, 64>}, {transform_indices = @transform_8, window_bounds = array<i64: 1, 1, 64>}, {transform_indices = @transform_9, window_bounds = array<i64: 1, 64, 256>}, {transform_indices = @transform_10, window_bounds = array<i64: 1, 1, 256>}, {transform_indices = @transform_11, window_bounds = array<i64: 1, 128, 64>}, {transform_indices = @transform_12, window_bounds = array<i64: 1, 1, 64>}, {transform_indices = @transform_13, window_bounds = array<i64: 1, 16, 64>}]} {
    %c0_i32 = arith.constant 0 : i32
    %0 = arith.cmpi eq, %arg1, %c0_i32 : i32
    %1 = arith.extui %0 : i1 to i32
    %c0_i32_0 = arith.constant 0 : i32
    %2 = arith.cmpi ne, %1, %c0_i32_0 : i32
    scf.if %2 {
      %c0_75 = arith.constant 0 : index
      %c0_76 = arith.constant 0 : index
      %c0_77 = arith.constant 0 : index
      %185 = vector.load %arg2[%c0_75, %c0_76, %c0_77] : memref<1x16x64xf32, #tpu.memory_space<vmem>>, vector<1x16x64xf32>
      %186 = vector.shape_cast %185 : vector<1x16x64xf32> to vector<16x64xf32>
      %c0_78 = arith.constant 0 : index
      %c0_79 = arith.constant 0 : index
      %c0_80 = arith.constant 0 : index
      %187 = vector.load %arg15[%c0_78, %c0_79, %c0_80] : memref<1x16x64xf32, #tpu.memory_space<vmem>>, vector<1x16x64xf32>
      %188 = vector.shape_cast %187 : vector<1x16x64xf32> to vector<16x64xf32>
      %189 = vector.shape_cast %186 : vector<16x64xf32> to vector<1x16x64xf32>
      tpu.vector_store %arg15[%c0_78, %c0_79, %c0_80], %189 {strides = array<i32>} : memref<1x16x64xf32, #tpu.memory_space<vmem>>, vector<1x16x64xf32>,
    } else {
    }
    %c0 = arith.constant 0 : index
    %c0_1 = arith.constant 0 : index
    %c0_2 = arith.constant 0 : index
    %3 = vector.load %arg15[%c0, %c0_1, %c0_2] : memref<1x16x64xf32, #tpu.memory_space<vmem>>, vector<1x16x64xf32>
    %4 = vector.shape_cast %3 : vector<1x16x64xf32> to vector<16x64xf32>
    %c0_3 = arith.constant 0 : index
    %c0_4 = arith.constant 0 : index
    %c0_5 = arith.constant 0 : index
    %5 = vector.load %arg7[%c0_3, %c0_4, %c0_5] : memref<1x1x64xf32, #tpu.memory_space<vmem>>, vector<1x1x64xf32>
    %6 = vector.shape_cast %5 : vector<1x1x64xf32> to vector<1x64xf32>
    %7 = arith.mulf %4, %4 : vector<16x64xf32>
    %cst = arith.constant dense<0.000000e+00> : vector<16xf32>
    %8 = vector.multi_reduction <add>, %7, %cst [1] : vector<16x64xf32> to vector<16xf32>
    %9 = vector.shape_cast %8 : vector<16xf32> to vector<16x1xf32>
    %cst_6 = arith.constant 6.400000e+01 : f32
    %10 = vector.broadcast %cst_6 : f32 to vector<16x1xf32>
    %11 = arith.divf %9, %10 : vector<16x1xf32>
    %cst_7 = arith.constant 9.99999974E-5 : f32
    %12 = vector.broadcast %cst_7 : f32 to vector<16x1xf32>
    %13 = arith.addf %11, %12 : vector<16x1xf32>
    %14 = math.rsqrt %13 : vector<16x1xf32>
    %15 = vector.broadcast %6 : vector<1x64xf32> to vector<16x64xf32>
    %16 = vector.broadcast %14 : vector<16x1xf32> to vector<16x64xf32>
    %17 = arith.mulf %15, %16 : vector<16x64xf32>
    %18 = arith.mulf %4, %17 : vector<16x64xf32>
    %19 = arith.truncf %18 : vector<16x64xf32> to vector<16x64xbf16>
    %c0_8 = arith.constant 0 : index
    %c0_9 = arith.constant 0 : index
    %c0_10 = arith.constant 0 : index
    %20 = vector.load %arg8[%c0_8, %c0_9, %c0_10] : memref<1x64x192xbf16, #tpu.memory_space<vmem>>, vector<1x64x192xbf16>
    %21 = vector.shape_cast %20 : vector<1x64x192xbf16> to vector<64x192xbf16>
    %cst_11 = arith.constant dense<0.000000e+00> : vector<16x192xf32>
    %22 = tpu.matmul %19, %21, %cst_11 {dimension_numbers = #tpu.dot_dimension_numbers<[1], [0], [0], [1], [0, 0, 1, 1], [], []>} : vector<16x64xbf16>, vector<64x192xbf16>, vector<16x192xf32> -> vector<16x192xf32>
    %23 = vector.extract_strided_slice %22 {offsets = [0, 0], sizes = [16, 64], strides = [1, 1]} : vector<16x192xf32> to vector<16x64xf32>
    %24 = vector.extract_strided_slice %22 {offsets = [0, 64], sizes = [16, 64], strides = [1, 1]} : vector<16x192xf32> to vector<16x64xf32>
    %25 = vector.extract_strided_slice %22 {offsets = [0, 128], sizes = [16, 64], strides = [1, 1]} : vector<16x192xf32> to vector<16x64xf32>
    %c0_12 = arith.constant 0 : index
    %c0_13 = arith.constant 0 : index
    %26 = vector.load %arg4[%c0_12, %c0_13] : memref<16x64xf32, #tpu.memory_space<vmem>>, vector<16x64xf32>
    %c0_14 = arith.constant 0 : index
    %c0_15 = arith.constant 0 : index
    %27 = vector.load %arg5[%c0_14, %c0_15] : memref<16x64xf32, #tpu.memory_space<vmem>>, vector<16x64xf32>
    %c0_16 = arith.constant 0 : index
    %c0_17 = arith.constant 0 : index
    %28 = vector.load %arg6[%c0_16, %c0_17] : memref<64x64xbf16, #tpu.memory_space<vmem>>, vector<64x64xbf16>
    %29 = arith.truncf %23 : vector<16x64xf32> to vector<16x64xbf16>
    %cst_18 = arith.constant dense<0.000000e+00> : vector<16x64xf32>
    %30 = tpu.matmul %29, %28, %cst_18 {dimension_numbers = #tpu.dot_dimension_numbers<[1], [0], [0], [1], [0, 0, 1, 1], [], []>} : vector<16x64xbf16>, vector<64x64xbf16>, vector<16x64xf32> -> vector<16x64xf32>
    %31 = arith.mulf %23, %26 : vector<16x64xf32>
    %32 = arith.mulf %30, %27 : vector<16x64xf32>
    %33 = arith.addf %31, %32 : vector<16x64xf32>
    %34 = arith.truncf %24 : vector<16x64xf32> to vector<16x64xbf16>
    %cst_19 = arith.constant dense<0.000000e+00> : vector<16x64xf32>
    %35 = tpu.matmul %34, %28, %cst_19 {dimension_numbers = #tpu.dot_dimension_numbers<[1], [0], [0], [1], [0, 0, 1, 1], [], []>} : vector<16x64xbf16>, vector<64x64xbf16>, vector<16x64xf32> -> vector<16x64xf32>
    %36 = arith.mulf %24, %26 : vector<16x64xf32>
    %37 = arith.mulf %35, %27 : vector<16x64xf32>
    %38 = arith.addf %36, %37 : vector<16x64xf32>
    %39 = tpu.iota {dimensions = array<i32: 0>} : vector<16x16xi32>
    %40 = tpu.iota {dimensions = array<i32: 1>} : vector<16x16xi32>
    %41 = arith.cmpi sgt, %40, %39 : vector<16x16xi32>
    %c0_20 = arith.constant 0 : index
    %c0_21 = arith.constant 0 : index
    %c0_22 = arith.constant 0 : index
    %42 = vector.load %arg3[%c0_20, %c0_21, %c0_22] : memref<1x1x16xf32, #tpu.memory_space<vmem>>, vector<1x1x16xf32>
    %43 = vector.shape_cast %42 : vector<1x1x16xf32> to vector<1x16xf32>
    %cst_23 = arith.constant 5.000000e-01 : f32
    %44 = vector.broadcast %cst_23 : f32 to vector<1x16xf32>
    %45 = arith.cmpf ogt, %43, %44 : vector<1x16xf32>
    %46 = vector.broadcast %45 : vector<1x16xi1> to vector<16x16xi1>
    %47 = arith.ori %41, %46 : vector<16x16xi1>
    %cst_24 = arith.constant 0.000000e+00 : f32
    %cst_25 = arith.constant -1.000000e+30 : f32
    %48 = vector.broadcast %cst_24 : f32 to vector<16x16xf32>
    %49 = vector.broadcast %cst_25 : f32 to vector<16x16xf32>
    %50 = arith.select %47, %48, %49 : vector<16x16xi1>, vector<16x16xf32>
    %51 = arith.truncf %33 : vector<16x64xf32> to vector<16x64xbf16>
    %52 = arith.truncf %38 : vector<16x64xf32> to vector<16x64xbf16>
    %53 = arith.truncf %25 : vector<16x64xf32> to vector<16x64xbf16>
    %c0_26 = arith.constant 0 : index
    %c0_27 = arith.constant 0 : index
    %c0_28 = arith.constant 0 : index
    %54 = vector.load %arg9[%c0_26, %c0_27, %c0_28] : memref<1x64x64xbf16, #tpu.memory_space<vmem>>, vector<1x64x64xbf16>
    %55 = vector.shape_cast %54 : vector<1x64x64xbf16> to vector<64x64xbf16>
    %56 = vector.extract_strided_slice %51 {offsets = [0, 0], sizes = [16, 16], strides = [1, 1]} : vector<16x64xbf16> to vector<16x16xbf16>
    %57 = vector.extract_strided_slice %52 {offsets = [0, 0], sizes = [16, 16], strides = [1, 1]} : vector<16x64xbf16> to vector<16x16xbf16>
    %cst_29 = arith.constant dense<0.000000e+00> : vector<16x16xf32>
    %58 = tpu.matmul %56, %57, %cst_29 {dimension_numbers = #tpu.dot_dimension_numbers<[1], [1], [0], [0], [0, 0, 1, 0], [], []>} : vector<16x16xbf16>, vector<16x16xbf16>, vector<16x16xf32> -> vector<16x16xf32>
    %59 = arith.addf %58, %50 : vector<16x16xf32>
    %cst_30 = arith.constant dense<0xFF800000> : vector<16xf32>
    %60 = vector.multi_reduction <maximumf>, %59, %cst_30 [1] : vector<16x16xf32> to vector<16xf32>
    %61 = vector.shape_cast %60 : vector<16xf32> to vector<16x1xf32>
    %62 = vector.broadcast %61 : vector<16x1xf32> to vector<16x16xf32>
    %63 = arith.subf %59, %62 : vector<16x16xf32>
    %64 = math.exp %63 : vector<16x16xf32>
    %cst_31 = arith.constant dense<0.000000e+00> : vector<16xf32>
    %65 = vector.multi_reduction <add>, %64, %cst_31 [1] : vector<16x16xf32> to vector<16xf32>
    %66 = vector.shape_cast %65 : vector<16xf32> to vector<16x1xf32>
    %67 = tpu.reciprocal %66 {approx = true} : vector<16x1xf32> -> vector<16x1xf32>
    %68 = vector.broadcast %67 : vector<16x1xf32> to vector<16x16xf32>
    %69 = arith.mulf %64, %68 : vector<16x16xf32>
    %70 = arith.truncf %69 : vector<16x16xf32> to vector<16x16xbf16>
    %71 = vector.extract_strided_slice %53 {offsets = [0, 0], sizes = [16, 16], strides = [1, 1]} : vector<16x64xbf16> to vector<16x16xbf16>
    %cst_32 = arith.constant dense<0.000000e+00> : vector<16x16xf32>
    %72 = tpu.matmul %70, %71, %cst_32 {dimension_numbers = #tpu.dot_dimension_numbers<[1], [0], [0], [1], [0, 0, 1, 1], [], []>} : vector<16x16xbf16>, vector<16x16xbf16>, vector<16x16xf32> -> vector<16x16xf32>
    %73 = arith.truncf %72 : vector<16x16xf32> to vector<16x16xbf16>
    %74 = vector.extract_strided_slice %55 {offsets = [0, 0], sizes = [16, 64], strides = [1, 1]} : vector<64x64xbf16> to vector<16x64xbf16>
    %cst_33 = arith.constant dense<0.000000e+00> : vector<16x64xf32>
    %75 = tpu.matmul %73, %74, %cst_33 {dimension_numbers = #tpu.dot_dimension_numbers<[1], [0], [0], [1], [0, 0, 1, 1], [], []>} : vector<16x16xbf16>, vector<16x64xbf16>, vector<16x64xf32> -> vector<16x64xf32>
    %76 = arith.addf %4, %75 : vector<16x64xf32>
    %77 = vector.extract_strided_slice %51 {offsets = [0, 16], sizes = [16, 16], strides = [1, 1]} : vector<16x64xbf16> to vector<16x16xbf16>
    %78 = vector.extract_strided_slice %52 {offsets = [0, 16], sizes = [16, 16], strides = [1, 1]} : vector<16x64xbf16> to vector<16x16xbf16>
    %cst_34 = arith.constant dense<0.000000e+00> : vector<16x16xf32>
    %79 = tpu.matmul %77, %78, %cst_34 {dimension_numbers = #tpu.dot_dimension_numbers<[1], [1], [0], [0], [0, 0, 1, 0], [], []>} : vector<16x16xbf16>, vector<16x16xbf16>, vector<16x16xf32> -> vector<16x16xf32>
    %80 = arith.addf %79, %50 : vector<16x16xf32>
    %cst_35 = arith.constant dense<0xFF800000> : vector<16xf32>
    %81 = vector.multi_reduction <maximumf>, %80, %cst_35 [1] : vector<16x16xf32> to vector<16xf32>
    %82 = vector.shape_cast %81 : vector<16xf32> to vector<16x1xf32>
    %83 = vector.broadcast %82 : vector<16x1xf32> to vector<16x16xf32>
    %84 = arith.subf %80, %83 : vector<16x16xf32>
    %85 = math.exp %84 : vector<16x16xf32>
    %cst_36 = arith.constant dense<0.000000e+00> : vector<16xf32>
    %86 = vector.multi_reduction <add>, %85, %cst_36 [1] : vector<16x16xf32> to vector<16xf32>
    %87 = vector.shape_cast %86 : vector<16xf32> to vector<16x1xf32>
    %88 = tpu.reciprocal %87 {approx = true} : vector<16x1xf32> -> vector<16x1xf32>
    %89 = vector.broadcast %88 : vector<16x1xf32> to vector<16x16xf32>
    %90 = arith.mulf %85, %89 : vector<16x16xf32>
    %91 = arith.truncf %90 : vector<16x16xf32> to vector<16x16xbf16>
    %92 = vector.extract_strided_slice %53 {offsets = [0, 16], sizes = [16, 16], strides = [1, 1]} : vector<16x64xbf16> to vector<16x16xbf16>
    %cst_37 = arith.constant dense<0.000000e+00> : vector<16x16xf32>
    %93 = tpu.matmul %91, %92, %cst_37 {dimension_numbers = #tpu.dot_dimension_numbers<[1], [0], [0], [1], [0, 0, 1, 1], [], []>} : vector<16x16xbf16>, vector<16x16xbf16>, vector<16x16xf32> -> vector<16x16xf32>
    %94 = arith.truncf %93 : vector<16x16xf32> to vector<16x16xbf16>
    %95 = vector.extract_strided_slice %55 {offsets = [16, 0], sizes = [16, 64], strides = [1, 1]} : vector<64x64xbf16> to vector<16x64xbf16>
    %cst_38 = arith.constant dense<0.000000e+00> : vector<16x64xf32>
    %96 = tpu.matmul %94, %95, %cst_38 {dimension_numbers = #tpu.dot_dimension_numbers<[1], [0], [0], [1], [0, 0, 1, 1], [], []>} : vector<16x16xbf16>, vector<16x64xbf16>, vector<16x64xf32> -> vector<16x64xf32>
    %97 = arith.addf %76, %96 : vector<16x64xf32>
    %98 = vector.extract_strided_slice %51 {offsets = [0, 32], sizes = [16, 16], strides = [1, 1]} : vector<16x64xbf16> to vector<16x16xbf16>
    %99 = vector.extract_strided_slice %52 {offsets = [0, 32], sizes = [16, 16], strides = [1, 1]} : vector<16x64xbf16> to vector<16x16xbf16>
    %cst_39 = arith.constant dense<0.000000e+00> : vector<16x16xf32>
    %100 = tpu.matmul %98, %99, %cst_39 {dimension_numbers = #tpu.dot_dimension_numbers<[1], [1], [0], [0], [0, 0, 1, 0], [], []>} : vector<16x16xbf16>, vector<16x16xbf16>, vector<16x16xf32> -> vector<16x16xf32>
    %101 = arith.addf %100, %50 : vector<16x16xf32>
    %cst_40 = arith.constant dense<0xFF800000> : vector<16xf32>
    %102 = vector.multi_reduction <maximumf>, %101, %cst_40 [1] : vector<16x16xf32> to vector<16xf32>
    %103 = vector.shape_cast %102 : vector<16xf32> to vector<16x1xf32>
    %104 = vector.broadcast %103 : vector<16x1xf32> to vector<16x16xf32>
    %105 = arith.subf %101, %104 : vector<16x16xf32>
    %106 = math.exp %105 : vector<16x16xf32>
    %cst_41 = arith.constant dense<0.000000e+00> : vector<16xf32>
    %107 = vector.multi_reduction <add>, %106, %cst_41 [1] : vector<16x16xf32> to vector<16xf32>
    %108 = vector.shape_cast %107 : vector<16xf32> to vector<16x1xf32>
    %109 = tpu.reciprocal %108 {approx = true} : vector<16x1xf32> -> vector<16x1xf32>
    %110 = vector.broadcast %109 : vector<16x1xf32> to vector<16x16xf32>
    %111 = arith.mulf %106, %110 : vector<16x16xf32>
    %112 = arith.truncf %111 : vector<16x16xf32> to vector<16x16xbf16>
    %113 = vector.extract_strided_slice %53 {offsets = [0, 32], sizes = [16, 16], strides = [1, 1]} : vector<16x64xbf16> to vector<16x16xbf16>
    %cst_42 = arith.constant dense<0.000000e+00> : vector<16x16xf32>
    %114 = tpu.matmul %112, %113, %cst_42 {dimension_numbers = #tpu.dot_dimension_numbers<[1], [0], [0], [1], [0, 0, 1, 1], [], []>} : vector<16x16xbf16>, vector<16x16xbf16>, vector<16x16xf32> -> vector<16x16xf32>
    %115 = arith.truncf %114 : vector<16x16xf32> to vector<16x16xbf16>
    %116 = vector.extract_strided_slice %55 {offsets = [32, 0], sizes = [16, 64], strides = [1, 1]} : vector<64x64xbf16> to vector<16x64xbf16>
    %cst_43 = arith.constant dense<0.000000e+00> : vector<16x64xf32>
    %117 = tpu.matmul %115, %116, %cst_43 {dimension_numbers = #tpu.dot_dimension_numbers<[1], [0], [0], [1], [0, 0, 1, 1], [], []>} : vector<16x16xbf16>, vector<16x64xbf16>, vector<16x64xf32> -> vector<16x64xf32>
    %118 = arith.addf %97, %117 : vector<16x64xf32>
    %119 = vector.extract_strided_slice %51 {offsets = [0, 48], sizes = [16, 16], strides = [1, 1]} : vector<16x64xbf16> to vector<16x16xbf16>
    %120 = vector.extract_strided_slice %52 {offsets = [0, 48], sizes = [16, 16], strides = [1, 1]} : vector<16x64xbf16> to vector<16x16xbf16>
    %cst_44 = arith.constant dense<0.000000e+00> : vector<16x16xf32>
    %121 = tpu.matmul %119, %120, %cst_44 {dimension_numbers = #tpu.dot_dimension_numbers<[1], [1], [0], [0], [0, 0, 1, 0], [], []>} : vector<16x16xbf16>, vector<16x16xbf16>, vector<16x16xf32> -> vector<16x16xf32>
    %122 = arith.addf %121, %50 : vector<16x16xf32>
    %cst_45 = arith.constant dense<0xFF800000> : vector<16xf32>
    %123 = vector.multi_reduction <maximumf>, %122, %cst_45 [1] : vector<16x16xf32> to vector<16xf32>
    %124 = vector.shape_cast %123 : vector<16xf32> to vector<16x1xf32>
    %125 = vector.broadcast %124 : vector<16x1xf32> to vector<16x16xf32>
    %126 = arith.subf %122, %125 : vector<16x16xf32>
    %127 = math.exp %126 : vector<16x16xf32>
    %cst_46 = arith.constant dense<0.000000e+00> : vector<16xf32>
    %128 = vector.multi_reduction <add>, %127, %cst_46 [1] : vector<16x16xf32> to vector<16xf32>
    %129 = vector.shape_cast %128 : vector<16xf32> to vector<16x1xf32>
    %130 = tpu.reciprocal %129 {approx = true} : vector<16x1xf32> -> vector<16x1xf32>
    %131 = vector.broadcast %130 : vector<16x1xf32> to vector<16x16xf32>
    %132 = arith.mulf %127, %131 : vector<16x16xf32>
    %133 = arith.truncf %132 : vector<16x16xf32> to vector<16x16xbf16>
    %134 = vector.extract_strided_slice %53 {offsets = [0, 48], sizes = [16, 16], strides = [1, 1]} : vector<16x64xbf16> to vector<16x16xbf16>
    %cst_47 = arith.constant dense<0.000000e+00> : vector<16x16xf32>
    %135 = tpu.matmul %133, %134, %cst_47 {dimension_numbers = #tpu.dot_dimension_numbers<[1], [0], [0], [1], [0, 0, 1, 1], [], []>} : vector<16x16xbf16>, vector<16x16xbf16>, vector<16x16xf32> -> vector<16x16xf32>
    %136 = arith.truncf %135 : vector<16x16xf32> to vector<16x16xbf16>
    %137 = vector.extract_strided_slice %55 {offsets = [48, 0], sizes = [16, 64], strides = [1, 1]} : vector<64x64xbf16> to vector<16x64xbf16>
    %cst_48 = arith.constant dense<0.000000e+00> : vector<16x64xf32>
    %138 = tpu.matmul %136, %137, %cst_48 {dimension_numbers = #tpu.dot_dimension_numbers<[1], [0], [0], [1], [0, 0, 1, 1], [], []>} : vector<16x16xbf16>, vector<16x64xbf16>, vector<16x64xf32> -> vector<16x64xf32>
    %139 = arith.addf %118, %138 : vector<16x64xf32>
    %c0_49 = arith.constant 0 : index
    %c0_50 = arith.constant 0 : index
    %c0_51 = arith.constant 0 : index
    %140 = vector.load %arg10[%c0_49, %c0_50, %c0_51] : memref<1x1x64xf32, #tpu.memory_space<vmem>>, vector<1x1x64xf32>
    %141 = vector.shape_cast %140 : vector<1x1x64xf32> to vector<1x64xf32>
    %142 = arith.mulf %139, %139 : vector<16x64xf32>
    %cst_52 = arith.constant dense<0.000000e+00> : vector<16xf32>
    %143 = vector.multi_reduction <add>, %142, %cst_52 [1] : vector<16x64xf32> to vector<16xf32>
    %144 = vector.shape_cast %143 : vector<16xf32> to vector<16x1xf32>
    %cst_53 = arith.constant 6.400000e+01 : f32
    %145 = vector.broadcast %cst_53 : f32 to vector<16x1xf32>
    %146 = arith.divf %144, %145 : vector<16x1xf32>
    %cst_54 = arith.constant 9.99999974E-5 : f32
    %147 = vector.broadcast %cst_54 : f32 to vector<16x1xf32>
    %148 = arith.addf %146, %147 : vector<16x1xf32>
    %149 = math.rsqrt %148 : vector<16x1xf32>
    %150 = vector.broadcast %141 : vector<1x64xf32> to vector<16x64xf32>
    %151 = vector.broadcast %149 : vector<16x1xf32> to vector<16x64xf32>
    %152 = arith.mulf %150, %151 : vector<16x64xf32>
    %153 = arith.mulf %139, %152 : vector<16x64xf32>
    %154 = arith.truncf %153 : vector<16x64xf32> to vector<16x64xbf16>
    %c0_55 = arith.constant 0 : index
    %c0_56 = arith.constant 0 : index
    %c0_57 = arith.constant 0 : index
    %155 = vector.load %arg11[%c0_55, %c0_56, %c0_57] : memref<1x64x256xbf16, #tpu.memory_space<vmem>>, vector<1x64x256xbf16>
    %156 = vector.shape_cast %155 : vector<1x64x256xbf16> to vector<64x256xbf16>
    %cst_58 = arith.constant dense<0.000000e+00> : vector<16x256xf32>
    %157 = tpu.matmul %154, %156, %cst_58 {dimension_numbers = #tpu.dot_dimension_numbers<[1], [0], [0], [1], [0, 0, 1, 1], [], []>} : vector<16x64xbf16>, vector<64x256xbf16>, vector<16x256xf32> -> vector<16x256xf32>
    %c0_59 = arith.constant 0 : index
    %c0_60 = arith.constant 0 : index
    %c0_61 = arith.constant 0 : index
    %158 = vector.load %arg12[%c0_59, %c0_60, %c0_61] : memref<1x1x256xf32, #tpu.memory_space<vmem>>, vector<1x1x256xf32>
    %159 = vector.shape_cast %158 : vector<1x1x256xf32> to vector<1x256xf32>
    %160 = vector.broadcast %159 : vector<1x256xf32> to vector<16x256xf32>
    %161 = arith.addf %157, %160 : vector<16x256xf32>
    %162 = vector.extract_strided_slice %161 {offsets = [0, 0], sizes = [16, 128], strides = [1, 1]} : vector<16x256xf32> to vector<16x128xf32>
    %163 = vector.extract_strided_slice %161 {offsets = [0, 128], sizes = [16, 128], strides = [1, 1]} : vector<16x256xf32> to vector<16x128xf32>
    %cst_62 = arith.constant 0.000000e+00 : f32
    %164 = vector.broadcast %cst_62 : f32 to vector<16x128xf32>
    %165 = arith.subf %164, %162 : vector<16x128xf32>
    %166 = math.exp %165 : vector<16x128xf32>
    %cst_63 = arith.constant 1.000000e+00 : f32
    %167 = vector.broadcast %cst_63 : f32 to vector<16x128xf32>
    %168 = arith.addf %167, %166 : vector<16x128xf32>
    %cst_64 = arith.constant 1.000000e+00 : f32
    %169 = vector.broadcast %cst_64 : f32 to vector<16x128xf32>
    %170 = arith.divf %169, %168 : vector<16x128xf32>
    %171 = arith.mulf %162, %170 : vector<16x128xf32>
    %172 = arith.mulf %171, %163 : vector<16x128xf32>
    %173 = arith.truncf %172 : vector<16x128xf32> to vector<16x128xbf16>
    %c0_65 = arith.constant 0 : index
    %c0_66 = arith.constant 0 : index
    %c0_67 = arith.constant 0 : index
    %174 = vector.load %arg13[%c0_65, %c0_66, %c0_67] : memref<1x128x64xbf16, #tpu.memory_space<vmem>>, vector<1x128x64xbf16>
    %175 = vector.shape_cast %174 : vector<1x128x64xbf16> to vector<128x64xbf16>
    %cst_68 = arith.constant dense<0.000000e+00> : vector<16x64xf32>
    %176 = tpu.matmul %173, %175, %cst_68 {dimension_numbers = #tpu.dot_dimension_numbers<[1], [0], [0], [1], [0, 0, 1, 1], [], []>} : vector<16x128xbf16>, vector<128x64xbf16>, vector<16x64xf32> -> vector<16x64xf32>
    %c0_69 = arith.constant 0 : index
    %c0_70 = arith.constant 0 : index
    %c0_71 = arith.constant 0 : index
    %177 = vector.load %arg14[%c0_69, %c0_70, %c0_71] : memref<1x1x64xf32, #tpu.memory_space<vmem>>, vector<1x1x64xf32>
    %178 = vector.shape_cast %177 : vector<1x1x64xf32> to vector<1x64xf32>
    %179 = vector.broadcast %178 : vector<1x64xf32> to vector<16x64xf32>
    %180 = arith.addf %176, %179 : vector<16x64xf32>
    %181 = arith.addf %139, %180 : vector<16x64xf32>
    %c0_72 = arith.constant 0 : index
    %c0_73 = arith.constant 0 : index
    %c0_74 = arith.constant 0 : index
    %182 = vector.load %arg15[%c0_72, %c0_73, %c0_74] : memref<1x16x64xf32, #tpu.memory_space<vmem>>, vector<1x16x64xf32>
    %183 = vector.shape_cast %182 : vector<1x16x64xf32> to vector<16x64xf32>
    %184 = vector.shape_cast %181 : vector<16x64xf32> to vector<1x16x64xf32>
    tpu.vector_store %arg15[%c0_72, %c0_73, %c0_74], %184 {strides = array<i32>} : memref<1x16x64xf32, #tpu.memory_space<vmem>>, vector<1x16x64xf32>,
    return
  }
  func.func @transform_0(%arg0: i32, %arg1: i32) -> (i32, i32, i32) {
    %c0_i32 = arith.constant 0 : i32
    %c0_i32_0 = arith.constant 0 : i32
    %c0_i32_1 = arith.constant 0 : i32
    return %arg0, %c0_i32, %c0_i32_0 : i32, i32, i32
  }
  func.func @transform_1(%arg0: i32, %arg1: i32) -> (i32, i32, i32) {
    %c0_i32 = arith.constant 0 : i32
    %c0_i32_0 = arith.constant 0 : i32
    %c0_i32_1 = arith.constant 0 : i32
    return %arg0, %c0_i32, %c0_i32_0 : i32, i32, i32
  }
  func.func @transform_2(%arg0: i32, %arg1: i32) -> (i32, i32) {
    %c0_i32 = arith.constant 0 : i32
    %c0_i32_0 = arith.constant 0 : i32
    %c0_i32_1 = arith.constant 0 : i32
    return %c0_i32, %c0_i32_0 : i32, i32
  }
  func.func @transform_3(%arg0: i32, %arg1: i32) -> (i32, i32) {
    %c0_i32 = arith.constant 0 : i32
    %c0_i32_0 = arith.constant 0 : i32
    %c0_i32_1 = arith.constant 0 : i32
    return %c0_i32, %c0_i32_0 : i32, i32
  }
  func.func @transform_4(%arg0: i32, %arg1: i32) -> (i32, i32) {
    %c0_i32 = arith.constant 0 : i32
    %c0_i32_0 = arith.constant 0 : i32
    %c0_i32_1 = arith.constant 0 : i32
    return %c0_i32, %c0_i32_0 : i32, i32
  }
  func.func @transform_5(%arg0: i32, %arg1: i32) -> (i32, i32, i32) {
    %c0_i32 = arith.constant 0 : i32
    %c0_i32_0 = arith.constant 0 : i32
    %c0_i32_1 = arith.constant 0 : i32
    return %arg1, %c0_i32, %c0_i32_0 : i32, i32, i32
  }
  func.func @transform_6(%arg0: i32, %arg1: i32) -> (i32, i32, i32) {
    %c0_i32 = arith.constant 0 : i32
    %c0_i32_0 = arith.constant 0 : i32
    %c0_i32_1 = arith.constant 0 : i32
    return %arg1, %c0_i32, %c0_i32_0 : i32, i32, i32
  }
  func.func @transform_7(%arg0: i32, %arg1: i32) -> (i32, i32, i32) {
    %c0_i32 = arith.constant 0 : i32
    %c0_i32_0 = arith.constant 0 : i32
    %c0_i32_1 = arith.constant 0 : i32
    return %arg1, %c0_i32, %c0_i32_0 : i32, i32, i32
  }
  func.func @transform_8(%arg0: i32, %arg1: i32) -> (i32, i32, i32) {
    %c0_i32 = arith.constant 0 : i32
    %c0_i32_0 = arith.constant 0 : i32
    %c0_i32_1 = arith.constant 0 : i32
    return %arg1, %c0_i32, %c0_i32_0 : i32, i32, i32
  }
  func.func @transform_9(%arg0: i32, %arg1: i32) -> (i32, i32, i32) {
    %c0_i32 = arith.constant 0 : i32
    %c0_i32_0 = arith.constant 0 : i32
    %c0_i32_1 = arith.constant 0 : i32
    return %arg1, %c0_i32, %c0_i32_0 : i32, i32, i32
  }
  func.func @transform_10(%arg0: i32, %arg1: i32) -> (i32, i32, i32) {
    %c0_i32 = arith.constant 0 : i32
    %c0_i32_0 = arith.constant 0 : i32
    %c0_i32_1 = arith.constant 0 : i32
    return %arg1, %c0_i32, %c0_i32_0 : i32, i32, i32
  }
  func.func @transform_11(%arg0: i32, %arg1: i32) -> (i32, i32, i32) {
    %c0_i32 = arith.constant 0 : i32
    %c0_i32_0 = arith.constant 0 : i32
    %c0_i32_1 = arith.constant 0 : i32
    return %arg1, %c0_i32, %c0_i32_0 : i32, i32, i32
  }
  func.func @transform_12(%arg0: i32, %arg1: i32) -> (i32, i32, i32) {
    %c0_i32 = arith.constant 0 : i32
    %c0_i32_0 = arith.constant 0 : i32
    %c0_i32_1 = arith.constant 0 : i32
    return %arg1, %c0_i32, %c0_i32_0 : i32, i32, i32
  }
  func.func @transform_13(%arg0: i32, %arg1: i32) -> (i32, i32, i32) {
    %c0_i32 = arith.constant 0 : i32
    %c0_i32_0 = arith.constant 0 : i32
    %c0_i32_1 = arith.constant 0 : i32
    return %arg0, %c0_i32, %c0_i32_0 : i32, i32, i32
  }
}

</mosaic_0001>

<llo_original>
// kernel: tile.14
$region0: #{tile.14}
  %s0 = inlined_call_operand.vmem [shape: f32[16,4,16], index: 0, kind: input, shape index: {}]
  %s1 = inlined_call_operand.vmem [shape: f32[16,64], index: 1, kind: output, shape index: {}]
  $region1: #{tile.14} parent=0
    #allocation0 [shape = 'u8[65536]{0}', space=vmem, size = 0x10000, scoped, tag = 'scoped mem for input reshape']
    %s3 = ssub.s32 16, 1
    %s4 = scalar_lea.vmem %s0, 60
    %v5 = vld [vmem:[%s4] sm:%s3]
    %s6 = scalar_lea.vmem [#allocation0], 120
    %7 = vst [vmem:[%s6] sm:%s3] %v5
    %s8 = scalar_lea.vmem %s0, 56
    %v9 = vld [vmem:[%s8] sm:%s3]
    %s10 = scalar_lea.vmem [#allocation0], 112
    %11 = vst [vmem:[%s10] sm:%s3] %v9
    %s12 = scalar_lea.vmem %s0, 52
    %v13 = vld [vmem:[%s12] sm:%s3]
    %s14 = scalar_lea.vmem [#allocation0], 104
    %15 = vst [vmem:[%s14] sm:%s3] %v13
    %s16 = scalar_lea.vmem %s0, 48
    %v17 = vld [vmem:[%s16] sm:%s3]
    %s18 = scalar_lea.vmem [#allocation0], 96
    %19 = vst [vmem:[%s18] sm:%s3] %v17
    %s20 = scalar_lea.vmem %s0, 44
    %v21 = vld [vmem:[%s20] sm:%s3]
    %s22 = scalar_lea.vmem [#allocation0], 88
    %23 = vst [vmem:[%s22] sm:%s3] %v21
    %s24 = scalar_lea.vmem %s0, 40
    %v25 = vld [vmem:[%s24] sm:%s3]
    %s26 = scalar_lea.vmem [#allocation0], 80
    %27 = vst [vmem:[%s26] sm:%s3] %v25
    %s28 = scalar_lea.vmem %s0, 36
    %v29 = vld [vmem:[%s28] sm:%s3]
    %s30 = scalar_lea.vmem [#allocation0], 72
    %31 = vst [vmem:[%s30] sm:%s3] %v29
    %s32 = scalar_lea.vmem %s0, 32
    %v33 = vld [vmem:[%s32] sm:%s3]
    %s34 = scalar_lea.vmem [#allocation0], 64
    %35 = vst [vmem:[%s34] sm:%s3] %v33
    %s36 = scalar_lea.vmem %s0, 28
    %v37 = vld [vmem:[%s36] sm:%s3]
    %s38 = scalar_lea.vmem [#allocation0], 56
    %39 = vst [vmem:[%s38] sm:%s3] %v37
    %s40 = scalar_lea.vmem %s0, 24
    %v41 = vld [vmem:[%s40] sm:%s3]
    %s42 = scalar_lea.vmem [#allocation0], 48
    %43 = vst [vmem:[%s42] sm:%s3] %v41
    %s44 = scalar_lea.vmem %s0, 20
    %v45 = vld [vmem:[%s44] sm:%s3]
    %s46 = scalar_lea.vmem [#allocation0], 40
    %47 = vst [vmem:[%s46] sm:%s3] %v45
    %s48 = scalar_lea.vmem %s0, 16
    %v49 = vld [vmem:[%s48] sm:%s3]
    %s50 = scalar_lea.vmem [#allocation0], 32
    %51 = vst [vmem:[%s50] sm:%s3] %v49
    %s52 = scalar_lea.vmem %s0, 12
    %v53 = vld [vmem:[%s52] sm:%s3]
    %s54 = scalar_lea.vmem [#allocation0], 24
    %55 = vst [vmem:[%s54] sm:%s3] %v53
    %s56 = scalar_lea.vmem %s0, 8
    %v57 = vld [vmem:[%s56] sm:%s3]
    %s58 = scalar_lea.vmem [#allocation0], 16
    %59 = vst [vmem:[%s58] sm:%s3] %v57
    %s60 = scalar_lea.vmem %s0, 4
    %v61 = vld [vmem:[%s60] sm:%s3]
    %s62 = scalar_lea.vmem [#allocation0], 8
    %63 = vst [vmem:[%s62] sm:%s3] %v61
    %v64 = vld [vmem:[%s0] sm:%s3]
    %65 = vst [vmem:[#allocation0] sm:%s3] %v64
    %v66 = vld [vmem:[#allocation0] ss:$8 sm:$0xf]
    %v67 = vld [vmem:[#allocation0] ss:$8 sm:$0xf0]
    %vm68 = vcmask 1047556
    %v69 = vsel %vm68, %v67, %v66
    %vm70 = vcmask 130048
    %71 = vst.msk [vmem:[%s1] sm:$0xff] %vm70, %v69
    %s72 = scalar_lea.vmem [#allocation0], 64
    %v73 = vld [vmem:[%s72] ss:$8 sm:$0xf]
    %s74 = scalar_lea.vmem [#allocation0], 64
    %v75 = vld [vmem:[%s74] ss:$8 sm:$0xf0]
    %vm76 = vcmask 1047556
    %v77 = vsel %vm76, %v75, %v73
    %vm78 = vcmask 130048
    %s79 = scalar_lea.vmem %s1, 8
    %80 = vst.msk [vmem:[%s79] sm:$0xff] %vm78, %v77
    %s81 = scalar_lea.vmem [#allocation0], 3
    %v82 = vld [vmem:[%s81] ss:$8 sm:$0xf]
    %s83 = scalar_lea.vmem [#allocation0], 3
    %v84 = vld [vmem:[%s83] ss:$8 sm:$0xf0]
    %vm85 = vcmask 1047556
    %v86 = vsel %vm85, %v84, %v82
    %87 = vrot.lane.b32.xlu0 %v86, 48
    %v88 = vpop.permute.xlu0 %87
    %vm89 = vcmask 523648
    %90 = vst.msk [vmem:[%s1] sm:$0xff] %vm89, %v88
    %s91 = scalar_lea.vmem [#allocation0], 67
    %v92 = vld [vmem:[%s91] ss:$8 sm:$0xf]
    %s93 = scalar_lea.vmem [#allocation0], 67
    %v94 = vld [vmem:[%s93] ss:$8 sm:$0xf0]
    %vm95 = vcmask 1047556
    %v96 = vsel %vm95, %v94, %v92
    %97 = vrot.lane.b32.xlu0 %v96, 48
    %v98 = vpop.permute.xlu0 %97
    %vm99 = vcmask 523648
    %s100 = scalar_lea.vmem %s1, 8
    %101 = vst.msk [vmem:[%s100] sm:$0xff] %vm99, %v98
    %s102 = scalar_lea.vmem [#allocation0], 2
    %v103 = vld [vmem:[%s102] ss:$8 sm:$0xf]
    %s104 = scalar_lea.vmem [#allocation0], 2
    %v105 = vld [vmem:[%s104] ss:$8 sm:$0xf0]
    %vm106 = vcmask 1047556
    %v107 = vsel %vm106, %v105, %v103
    %108 = vrot.lane.b32.xlu0 %v107, 32
    %v109 = vpop.permute.xlu0 %108
    %vm110 = vcmask 392448
    %111 = vst.msk [vmem:[%s1] sm:$0xff] %vm110, %v109
    %s112 = scalar_lea.vmem [#allocation0], 66
    %v113 = vld [vmem:[%s112] ss:$8 sm:$0xf]
    %s114 = scalar_lea.vmem [#allocation0], 66
    %v115 = vld [vmem:[%s114] ss:$8 sm:$0xf0]
    %vm116 = vcmask 1047556
    %v117 = vsel %vm116, %v115, %v113
    %118 = vrot.lane.b32.xlu0 %v117, 32
    %v119 = vpop.permute.xlu0 %118
    %vm120 = vcmask 392448
    %s121 = scalar_lea.vmem %s1, 8
    %122 = vst.msk [vmem:[%s121] sm:$0xff] %vm120, %v119
    %s123 = scalar_lea.vmem [#allocation0], 1
    %v124 = vld [vmem:[%s123] ss:$8 sm:$0xf]
    %s125 = scalar_lea.vmem [#allocation0], 1
    %v126 = vld [vmem:[%s125] ss:$8 sm:$0xf0]
    %vm127 = vcmask 1047556
    %v128 = vsel %vm127, %v126, %v124
    %129 = vrot.lane.b32.xlu0 %v128, 16
    %v130 = vpop.permute.xlu0 %129
    %vm131 = vcmask 261248
    %132 = vst.msk [vmem:[%s1] sm:$0xff] %vm131, %v130
    %s133 = scalar_lea.vmem [#allocation0], 65
    %v134 = vld [vmem:[%s133] ss:$8 sm:$0xf]
    %s135 = scalar_lea.vmem [#allocation0], 65
    %v136 = vld [vmem:[%s135] ss:$8 sm:$0xf0]
    %vm137 = vcmask 1047556
    %v138 = vsel %vm137, %v136, %v134
    %139 = vrot.lane.b32.xlu0 %v138, 16
    %v140 = vpop.permute.xlu0 %139
    %vm141 = vcmask 261248
    %s142 = scalar_lea.vmem %s1, 8
    %143 = vst.msk [vmem:[%s142] sm:$0xff] %vm141, %v140

// kernel: modern_transformer_lm_forward.3
$region0: #{modern_transformer_lm_forward.3}
  #allocation0 [shape = 'u32[]', space=smem, size = 0x4, offset = 0x4, fixed_abs, tag = 'smem constant byte address 0x4 - core index']
  #allocation1 [shape = 'u32[72,128]{1,0:T(1,128)}', space=vmem, size = 0x9000, scoped, tag = 'internal scratch']
  %s0 = inlined_call_operand.vmem [shape: f32[32,64], index: 0, kind: input, shape index: {}]
  %s1 = inlined_call_operand.vmem [shape: f32[1,64], index: 1, kind: input, shape index: {}]
  %s2 = inlined_call_operand.vmem [shape: bf16[256,64], index: 2, kind: input, shape index: {}]
  %s3 = inlined_call_operand.hbm [shape: f32[32,256], index: 3, kind: output, shape index: {}]
  %s4 = sld [smem:[#allocation0]]
  $region22: #{modern_transformer_lm_forward.3} parent=0
    _
  %s6 = ssub.s32 1, %s4
  %s7 = scalar_select 0, %s6, %s4
  $region1: #{modern_transformer_lm_forward.3} parent=0
    #allocation2 [shape = 'u8[32768]{0}', space=vmem, size = 0x8000, scoped, tag = 'output window, operand 0, single buffered']
    #allocation3 [shape = 's32[1]{0}', space=sflag, size = 0x4, scoped, tag = 'scoped memory for modern_transformer_lm_forward.3']
    %8 = vsyncpa [#allocation3], 0
    // Predicated region
    $region2: #{modern_transformer_lm_forward.3} parent=1 // pred_check
      _
    $region3: #{modern_transformer_lm_forward.3} parent=1 // pred_check_branch
      %10 = sbr.rel (0) target = $region5
    $region4: #{modern_transformer_lm_forward.3} parent=1 // pred_region
      _
    $region5: #{modern_transformer_lm_forward.3} parent=1 // pred_fallthru
      _
    // Predicated region
    $region6: #{modern_transformer_lm_forward.3} parent=1 // pred_check
      _
    $region7: #{modern_transformer_lm_forward.3} parent=1 // pred_check_branch
      %12 = sbr.rel (0) target = $region9
    $region8: #{modern_transformer_lm_forward.3} parent=1 // pred_region
      _
    $region9: #{modern_transformer_lm_forward.3} parent=1 // pred_fallthru
      _
    // Predicated region
    $region10: #{modern_transformer_lm_forward.3} parent=1 // pred_check
      _
    $region11: #{modern_transformer_lm_forward.3} parent=1 // pred_check_branch
      %14 = sbr.rel (0) target = $region13
    $region12: #{modern_transformer_lm_forward.3} parent=1 // pred_region
      _
    $region13: #{modern_transformer_lm_forward.3} parent=1 // pred_fallthru
      _
    %v15 = vld [vmem:[%s0] sm:$0xff]
    %v16 = vld [vmem:[%s0 + $0x8] sm:$0xff]
    %v17 = vld [vmem:[%s0 + $0x10] sm:$0xff]
    %v18 = vld [vmem:[%s0 + $0x18] sm:$0xff]
    %v19 = vld [vmem:[%s1] sm:$0x1]
    %v20 = vmul.f32 %v15, %v15
    %v21 = vmul.f32 %v16, %v16
    %v22 = vmul.f32 %v17, %v17
    %v23 = vmul.f32 %v18, %v18
    %vm24 = vcmask 523264
    %v25 = vsel %vm24, %v20, 0.0
    %26 = vadd.xlane.f32.xlu0 %v25
    %v27 = vpop.xlane.xlu0 %26
    %v28 = vsel %vm24, %v21, 0.0
    %29 = vadd.xlane.f32.xlu0 %v28
    %v30 = vpop.xlane.xlu0 %29
    %v31 = vsel %vm24, %v22, 0.0
    %32 = vadd.xlane.f32.xlu0 %v31
    %v33 = vpop.xlane.xlu0 %32
    %v34 = vsel %vm24, %v23, 0.0
    %35 = vadd.xlane.f32.xlu0 %v34
    %v36 = vpop.xlane.xlu0 %35
    %v37 = vrcp.pop 64.0
    %v38 = vmul.f32 64.0, %v37
    %v39 = vsub.f32 1.0, %v38
    %v40 = vmul.f32 %v37, %v39
    %v41 = vadd.f32 %v37, %v40
    %vm42 = vweird.f32 %v37
    %v43 = vsel %vm42, %v37, %v41
    %v44 = vmul.f32 %v27, %v43
    %v45 = vmul.f32 %v30, %v43
    %v46 = vmul.f32 %v33, %v43
    %v47 = vmul.f32 %v36, %v43
    %v48 = vadd.f32 %v44, 0.0001
    %v49 = vadd.f32 %v45, 0.0001
    %v50 = vadd.f32 %v46, 0.0001
    %v51 = vadd.f32 %v47, 0.0001
    %v52 = vrsqrt.pop %v48
    %v53 = vmul.f32 %v52, %v48
    %v54 = vmul.f32 %v53, %v52
    %v55 = vmul.f32 0.5, %v54
    %v56 = vsub.f32 1.5, %v55
    %v57 = vmul.f32 %v52, %v56
    %vm58 = vweird.f32 %v48
    %vm59 = vweird.f32 %v52
    %vm60 = vmor %vm58, %vm59
    %v61 = vsel %vm60, %v52, %v57
    %v62 = vrsqrt.pop %v49
    %v63 = vmul.f32 %v62, %v49
    %v64 = vmul.f32 %v63, %v62
    %v65 = vmul.f32 0.5, %v64
    %v66 = vsub.f32 1.5, %v65
    %v67 = vmul.f32 %v62, %v66
    %vm68 = vweird.f32 %v49
    %vm69 = vweird.f32 %v62
    %vm70 = vmor %vm68, %vm69
    %v71 = vsel %vm70, %v62, %v67
    %v72 = vrsqrt.pop %v50
    %v73 = vmul.f32 %v72, %v50
    %v74 = vmul.f32 %v73, %v72
    %v75 = vmul.f32 0.5, %v74
    %v76 = vsub.f32 1.5, %v75
    %v77 = vmul.f32 %v72, %v76
    %vm78 = vweird.f32 %v50
    %vm79 = vweird.f32 %v72
    %vm80 = vmor %vm78, %vm79
    %v81 = vsel %vm80, %v72, %v77
    %v82 = vrsqrt.pop %v51
    %v83 = vmul.f32 %v82, %v51
    %v84 = vmul.f32 %v83, %v82
    %v85 = vmul.f32 0.5, %v84
    %v86 = vsub.f32 1.5, %v85
    %v87 = vmul.f32 %v82, %v86
    %vm88 = vweird.f32 %v51
    %vm89 = vweird.f32 %v82
    %vm90 = vmor %vm88, %vm89
    %v91 = vsel %vm90, %v82, %v87
    %v93 = vperm.slane %v19, 0
    %v95 = vmul.f32 %v93, %v61
    %v96 = vmul.f32 %v93, %v71
    %v97 = vmul.f32 %v93, %v81
    %v98 = vmul.f32 %v93, %v91
    %v99 = vmul.f32 %v15, %v95
    %v100 = vmul.f32 %v16, %v96
    %v101 = vmul.f32 %v17, %v97
    %v102 = vmul.f32 %v18, %v98
    %v103 = vpack.c.bf16 %v100, %v99
    %v104 = vpack.c.bf16 %v102, %v101
    %v105 = vld [vmem:[%s2] sm:$0xf]
    %v106 = vld [vmem:[%s2 + $0x4] sm:$0xf]
    %v107 = vld [vmem:[%s2 + $0x8] sm:$0xf]
    %v108 = vld [vmem:[%s2 + $0xc] sm:$0xf]
    %v109 = vld [vmem:[%s2 + $0x10] sm:$0xf]
    %v110 = vld [vmem:[%s2 + $0x14] sm:$0xf]
    %v111 = vld [vmem:[%s2 + $0x18] sm:$0xf]
    %v112 = vld [vmem:[%s2 + $0x1c] sm:$0xf]
    %v113 = vld [vmem:[%s2 + $0x20] sm:$0xf]
    %v114 = vld [vmem:[%s2 + $0x24] sm:$0xf]
    %v115 = vld [vmem:[%s2 + $0x28] sm:$0xf]
    %v116 = vld [vmem:[%s2 + $0x2c] sm:$0xf]
    %v117 = vld [vmem:[%s2 + $0x30] sm:$0xf]
    %v118 = vld [vmem:[%s2 + $0x34] sm:$0xf]
    %v119 = vld [vmem:[%s2 + $0x38] sm:$0xf]
    %v120 = vld [vmem:[%s2 + $0x3c] sm:$0xf]
    %v121 = vld [vmem:[%s2 + $0x40] sm:$0xf]
    %v122 = vld [vmem:[%s2 + $0x44] sm:$0xf]
    %v123 = vld [vmem:[%s2 + $0x48] sm:$0xf]
    %v124 = vld [vmem:[%s2 + $0x4c] sm:$0xf]
    %v125 = vld [vmem:[%s2 + $0x50] sm:$0xf]
    %v126 = vld [vmem:[%s2 + $0x54] sm:$0xf]
    %v127 = vld [vmem:[%s2 + $0x58] sm:$0xf]
    %v128 = vld [vmem:[%s2 + $0x5c] sm:$0xf]
    %v129 = vld [vmem:[%s2 + $0x60] sm:$0xf]
    %v130 = vld [vmem:[%s2 + $0x64] sm:$0xf]
    %v131 = vld [vmem:[%s2 + $0x68] sm:$0xf]
    %v132 = vld [vmem:[%s2 + $0x6c] sm:$0xf]
    %v133 = vld [vmem:[%s2 + $0x70] sm:$0xf]
    %v134 = vld [vmem:[%s2 + $0x74] sm:$0xf]
    %v135 = vld [vmem:[%s2 + $0x78] sm:$0xf]
    %v136 = vld [vmem:[%s2 + $0x7c] sm:$0xf]
    %v169 = vunpack.c.l.b16 %v105
    %v170 = vunpack.c.l.b16 %v106
    %v171 = vunpack.c.l.b16 %v107
    %v172 = vunpack.c.l.b16 %v108
    %v173 = vunpack.c.l.b16 %v109
    %v174 = vunpack.c.l.b16 %v110
    %v175 = vunpack.c.l.b16 %v111
    %v176 = vunpack.c.l.b16 %v112
    %v177 = vunpack.c.l.b16 %v113
    %v178 = vunpack.c.l.b16 %v114
    %v179 = vunpack.c.l.b16 %v115
    %v180 = vunpack.c.l.b16 %v116
    %v181 = vunpack.c.l.b16 %v117
    %v182 = vunpack.c.l.b16 %v118
    %v183 = vunpack.c.l.b16 %v119
    %v184 = vunpack.c.l.b16 %v120
    %v185 = vunpack.c.l.b16 %v121
    %v186 = vunpack.c.l.b16 %v122
    %v187 = vunpack.c.l.b16 %v123
    %v188 = vunpack.c.l.b16 %v124
    %v189 = vunpack.c.l.b16 %v125
    %v190 = vunpack.c.l.b16 %v126
    %v191 = vunpack.c.l.b16 %v127
    %v192 = vunpack.c.l.b16 %v128
    %v193 = vunpack.c.l.b16 %v129
    %v194 = vunpack.c.l.b16 %v130
    %v195 = vunpack.c.l.b16 %v131
    %v196 = vunpack.c.l.b16 %v132
    %v197 = vunpack.c.l.b16 %v133
    %v198 = vunpack.c.l.b16 %v134
    %v199 = vunpack.c.l.b16 %v135
    %v200 = vunpack.c.l.b16 %v136
    %v201 = vpack.c.b16 %v170, %v169
    %v202 = vpack.c.b16 %v172, %v171
    %v203 = vpack.c.b16 %v174, %v173
    %v204 = vpack.c.b16 %v176, %v175
    %v205 = vpack.c.b16 %v178, %v177
    %v206 = vpack.c.b16 %v180, %v179
    %v207 = vpack.c.b16 %v182, %v181
    %v208 = vpack.c.b16 %v184, %v183
    %v209 = vpack.c.b16 %v186, %v185
    %v210 = vpack.c.b16 %v188, %v187
    %v211 = vpack.c.b16 %v190, %v189
    %v212 = vpack.c.b16 %v192, %v191
    %v213 = vpack.c.b16 %v194, %v193
    %v214 = vpack.c.b16 %v196, %v195
    %v215 = vpack.c.b16 %v198, %v197
    %v216 = vpack.c.b16 %v200, %v199
    %v218 = vsel %vm24, %v103, 0
    %v221 = vsel %vm24, %v104, 0
    %v224 = vsel %vm24, %v201, 0
    %v227 = vsel %vm24, %v202, 0
    %v230 = vsel %vm24, %v203, 0
    %v233 = vsel %vm24, %v204, 0
    %v236 = vsel %vm24, %v205, 0
    %v239 = vsel %vm24, %v206, 0
    %v242 = vsel %vm24, %v207, 0
    %v245 = vsel %vm24, %v208, 0
    %v248 = vsel %vm24, %v209, 0
    %v251 = vsel %vm24, %v210, 0
    %v254 = vsel %vm24, %v211, 0
    %v257 = vsel %vm24, %v212, 0
    %v260 = vsel %vm24, %v213, 0
    %v263 = vsel %vm24, %v214, 0
    %v266 = vsel %vm24, %v215, 0
    %v269 = vsel %vm24, %v216, 0
    %271 = vmatpush.bf16.xpose.msra.mxu0 %v245
    %272 = vmatpush.bf16.xpose.msra.mxu0 %v242
    %273 = vmatpush.bf16.xpose.msra.mxu0 %v239
    %274 = vmatpush.bf16.xpose.msra.mxu0 %v236
    %275 = vmatpush.bf16.xpose.msra.mxu0 %v233
    %276 = vmatpush.bf16.xpose.msra.mxu0 %v230
    %277 = vmatpush.bf16.xpose.msra.mxu0 %v227
    %278 = vmatpush.bf16.xpose.msra.mxu0 %v224
    %279 = vmatmul.bf16.gmra.mxu0 %v218
    %v280 = vpop.f32.mrf.mxu0
    %v281 = vadd.f32 0.0, %v280
    %v282 = vpop.f32.mrf.mxu0
    %v283 = vadd.f32 0.0, %v282
    %284 = vmatmul.bf16.gmra.mxu0 %v221
    %v285 = vpop.f32.mrf.mxu0
    %v286 = vadd.f32 0.0, %v285
    %v287 = vpop.f32.mrf.mxu0
    %v288 = vadd.f32 0.0, %v287
    %289 = vdwg.mxu0
    %290 = vmatpush.bf16.xpose.msra.mxu0 %v269
    %291 = vmatpush.bf16.xpose.msra.mxu0 %v266
    %292 = vmatpush.bf16.xpose.msra.mxu0 %v263
    %293 = vmatpush.bf16.xpose.msra.mxu0 %v260
    %294 = vmatpush.bf16.xpose.msra.mxu0 %v257
    %295 = vmatpush.bf16.xpose.msra.mxu0 %v254
    %296 = vmatpush.bf16.xpose.msra.mxu0 %v251
    %297 = vmatpush.bf16.xpose.msra.mxu0 %v248
    %298 = vmatmul.bf16.gmra.mxu0 %v218
    %v299 = vpop.f32.mrf.mxu0
    %v300 = vadd.f32 0.0, %v299
    %v301 = vpop.f32.mrf.mxu0
    %v302 = vadd.f32 0.0, %v301
    %303 = vmatmul.bf16.gmra.mxu0 %v221
    %v304 = vpop.f32.mrf.mxu0
    %v305 = vadd.f32 0.0, %v304
    %v306 = vpop.f32.mrf.mxu0
    %v307 = vadd.f32 0.0, %v306
    %308 = vdwg.mxu0
    %309 = vst [vmem:[#allocation2] sm:$0xff] %v281
    %310 = vst [vmem:[#allocation2 + $0x8] sm:$0xff] %v300
    %311 = vst [vmem:[#allocation2 + $0x10] sm:$0xff] %v283
    %312 = vst [vmem:[#allocation2 + $0x18] sm:$0xff] %v302
    %313 = vst [vmem:[#allocation2 + $0x20] sm:$0xff] %v286
    %314 = vst [vmem:[#allocation2 + $0x28] sm:$0xff] %v305
    %315 = vst [vmem:[#allocation2 + $0x30] sm:$0xff] %v288
    %316 = vst [vmem:[#allocation2 + $0x38] sm:$0xff] %v307
    // Predicated region
    $region14: #{modern_transformer_lm_forward.3} parent=1 // pred_check
      _
    $region15: #{modern_transformer_lm_forward.3} parent=1 // pred_check_branch
      %318 = sbr.rel (0) target = $region17
    $region16: #{modern_transformer_lm_forward.3} parent=1 // pred_region
      %320 = vsyncadd [#allocation3], 0
      %s321 = sshll.u32 [#allocation2], 4
      %s322 = int_to_ptr.vmem [resolvable:$true] %s321
      %s323 = sshll.u32 %s3, 4
      %s324 = int_to_ptr.hbm [resolvable:$true] %s323
      %329 = dma.vmem_to_hbm [thread:$0]  %s322, 1024, %s324, [#allocation3], 256, 256, 16
    $region17: #{modern_transformer_lm_forward.3} parent=1 // pred_fallthru
      _
    // Predicated region
    $region18: #{modern_transformer_lm_forward.3} parent=1 // pred_check
      _
    $region19: #{modern_transformer_lm_forward.3} parent=1 // pred_check_branch
      %331 = sbr.rel (0) target = $region21
    $region20: #{modern_transformer_lm_forward.3} parent=1 // pred_region
      %333 = dma.done [#allocation3], 1024
    $region21: #{modern_transformer_lm_forward.3} parent=1 // pred_fallthru
      _
    %334 = vsyncpa [#allocation3], 1

// kernel: modern_transformer_lm_forward.2
$region0: #{modern_transformer_lm_forward.2}
  #allocation0 [shape = 'u32[]', space=smem, size = 0x4, offset = 0x4, fixed_abs, tag = 'smem constant byte address 0x4 - core index']
  #allocation1 [shape = 'u32[72,128]{1,0:T(1,128)}', space=vmem, size = 0x9000, scoped, tag = 'internal scratch']
  %s0 = inlined_call_operand.vmem [shape: f32[2,16,64], index: 0, kind: input, shape index: {}]
  %s1 = inlined_call_operand.vmem [shape: f32[2,1,16], index: 1, kind: input, shape index: {}]
  %s2 = inlined_call_operand.vmem [shape: f32[16,64], index: 2, kind: input, shape index: {}]
  %s3 = inlined_call_operand.vmem [shape: f32[16,64], index: 3, kind: input, shape index: {}]
  %s4 = inlined_call_operand.vmem [shape: bf16[64,64], index: 4, kind: input, shape index: {}]
  %s5 = inlined_call_operand.vmem [shape: f32[2,1,64], index: 5, kind: input, shape index: {}]
  %s6 = inlined_call_operand.vmem [shape: bf16[2,64,192], index: 6, kind: input, shape index: {}]
  %s7 = inlined_call_operand.vmem [shape: bf16[2,64,64], index: 7, kind: input, shape index: {}]
  %s8 = inlined_call_operand.vmem [shape: f32[2,1,64], index: 8, kind: input, shape index: {}]
  %s9 = inlined_call_operand.vmem [shape: bf16[2,64,256], index: 9, kind: input, shape index: {}]
  %s10 = inlined_call_operand.vmem [shape: f32[2,1,256], index: 10, kind: input, shape index: {}]
  %s11 = inlined_call_operand.vmem [shape: bf16[2,128,64], index: 11, kind: input, shape index: {}]
  %s12 = inlined_call_operand.vmem [shape: f32[2,1,64], index: 12, kind: input, shape index: {}]
  %s13 = inlined_call_operand.vmem [shape: f32[2,16,64], index: 13, kind: output, shape index: {}]
  %s14 = sld [smem:[#allocation0]]
  $region89: #{modern_transformer_lm_forward.2} parent=0
    _
  %s16 = ssub.s32 1, %s14
  %s17 = scalar_select 0, %s16, %s14
  loop: start=0, step=1, limit=6
  $region2: #{modern_transformer_lm_forward.2} parent=0 // loop_pre_header
    _
  $region3: #{modern_transformer_lm_forward.2} parent=0 // loop_header
    %s19 = sphi 0, %s23
    %p20 = scmp.ge.s32.totalorder %s19, 6
    %s26 = sphi 0, %s38
    %s27 = sphi 0, %s34
    %s28 = sphi 0, %s26
    %s29 = sphi 0, %s27
    %s30 = sphi 0, %s28
    %s31 = sphi 0, %s29
    %s41 = sphi 0, %s43
    %s44 = sphi 0, %s41
    %s45 = sphi 0, %s44
    %s61 = sphi 0, %s45
    %s67 = sphi 0, %s69
    %s70 = sphi 0, %s67
    %s71 = sphi 0, %s70
    %s87 = sphi 0, %s71
    %s91 = sphi 0, %s91
    %s93 = sphi 0, %s91
    %s94 = sphi 0, %s93
    %s108 = sphi 0, %s94
    %s112 = sphi 0, %s112
    %s114 = sphi 0, %s112
    %s115 = sphi 0, %s114
    %s129 = sphi 0, %s115
    %s133 = sphi 0, %s133
    %s135 = sphi 0, %s133
    %s136 = sphi 0, %s135
    %s150 = sphi 0, %s136
    %s156 = sphi 0, %s158
    %s159 = sphi 0, %s156
    %s160 = sphi 0, %s159
    %s176 = sphi 0, %s160
    %s182 = sphi 0, %s184
    %s185 = sphi 0, %s182
    %s186 = sphi 0, %s185
    %s202 = sphi 0, %s186
    %s208 = sphi 0, %s210
    %s211 = sphi 0, %s208
    %s212 = sphi 0, %s211
    %s228 = sphi 0, %s212
    %s234 = sphi 0, %s236
    %s237 = sphi 0, %s234
    %s238 = sphi 0, %s237
    %s254 = sphi 0, %s238
    %s260 = sphi 0, %s262
    %s263 = sphi 0, %s260
    %s264 = sphi 0, %s263
    %s280 = sphi 0, %s264
    %s286 = sphi 0, %s288
    %s289 = sphi 0, %s286
    %s290 = sphi 0, %s289
    %s306 = sphi 0, %s290
    %s312 = sphi 0, %s314
    %s315 = sphi 0, %s312
    %s316 = sphi 0, %s315
    %s332 = sphi 0, %s316
    %s338 = sphi 0, %s340
    %s341 = sphi 0, %s338
    %s342 = sphi 0, %s341
    %s358 = sphi 0, %s342
    %s364 = sphi 0, %s366
    %s367 = sphi 0, %s364
    %s368 = sphi 0, %s367
    %s384 = sphi 0, %s368
  $region4: #{modern_transformer_lm_forward.2} parent=0 // loop_header_branch
    %22 = sbr.rel (%p20) target = $region8
  $region5: #{modern_transformer_lm_forward.2} parent=0 // loop_body
    %s24 = ssub.s32 %s19, 1
    %s25 = ssub.s32 %s19, 2
    %s32 = sadd.s32 1, %s27
    %p33 = scmp.ge.s32.totalorder %s32, 2
    %s34 = scalar_select %p33, 0, %s32
    %s35 = sadd.s32 1, %s26
    %s36 = scalar_select %p33, %s35, %s26
    %p37 = scmp.ge.s32.totalorder %s36, 2
    %s38 = scalar_select %p37, 0, %s36
    %s39 = ssub.s32 %s26, %s38
    %p40 = scmp.eq.s32.totalorder %s39, 0
    %s42 = sadd.s32 %s41, 1
    %s43 = scalar_select %p40, %s41, %s42
    %p46 = pneg %p40
    %p47 = scmp.eq.s32.totalorder %s19, 3
    %p48 = por %p46, %p47
    %p49 = scmp.ne.s32.totalorder %s41, %s44
    %p50 = scmp.eq.s32.totalorder %s19, 0
    %p51 = por %p49, %p50
    %p52 = scmp.ne.s32.totalorder %s41, %s44
    %p53 = scmp.eq.s32.totalorder %s24, 3
    %p54 = por %p52, %p53
    %p55 = scmp.ne.s32.totalorder %s44, %s45
    %p56 = scmp.eq.s32.totalorder %s24, 0
    %p57 = por %p55, %p56
    %p58 = scmp.ne.s32.totalorder %s44, %s45
    %p59 = scmp.eq.s32.totalorder %s25, 3
    %p60 = por %p58, %p59
    %p62 = scmp.ne.s32.totalorder %s45, %s61
    %p63 = scmp.eq.s32.totalorder %s25, 0
    %p64 = por %p62, %p63
    %s65 = ssub.s32 %s26, %s38
    %p66 = scmp.eq.s32.totalorder %s65, 0
    %s68 = sadd.s32 %s67, 1
    %s69 = scalar_select %p66, %s67, %s68
    %p72 = pneg %p66
    %p73 = scmp.eq.s32.totalorder %s19, 3
    %p74 = por %p72, %p73
    %p75 = scmp.ne.s32.totalorder %s67, %s70
    %p76 = scmp.eq.s32.totalorder %s19, 0
    %p77 = por %p75, %p76
    %p78 = scmp.ne.s32.totalorder %s67, %s70
    %p79 = scmp.eq.s32.totalorder %s24, 3
    %p80 = por %p78, %p79
    %p81 = scmp.ne.s32.totalorder %s70, %s71
    %p82 = scmp.eq.s32.totalorder %s24, 0
    %p83 = por %p81, %p82
    %p84 = scmp.ne.s32.totalorder %s70, %s71
    %p85 = scmp.eq.s32.totalorder %s25, 3
    %p86 = por %p84, %p85
    %p88 = scmp.ne.s32.totalorder %s71, %s87
    %p89 = scmp.eq.s32.totalorder %s25, 0
    %p90 = por %p88, %p89
    %s92 = sadd.s32 %s91, 1
    %p95 = scmp.eq.s32.totalorder %s19, 3
    %p96 = scmp.ne.s32.totalorder %s91, %s93
    %p97 = scmp.eq.s32.totalorder %s19, 0
    %p98 = por %p96, %p97
    %p99 = scmp.ne.s32.totalorder %s91, %s93
    %p100 = scmp.eq.s32.totalorder %s24, 3
    %p101 = por %p99, %p100
    %p102 = scmp.ne.s32.totalorder %s93, %s94
    %p103 = scmp.eq.s32.totalorder %s24, 0
    %p104 = por %p102, %p103
    %p105 = scmp.ne.s32.totalorder %s93, %s94
    %p106 = scmp.eq.s32.totalorder %s25, 3
    %p107 = por %p105, %p106
    %p109 = scmp.ne.s32.totalorder %s94, %s108
    %p110 = scmp.eq.s32.totalorder %s25, 0
    %p111 = por %p109, %p110
    %s113 = sadd.s32 %s112, 1
    %p116 = scmp.eq.s32.totalorder %s19, 3
    %p117 = scmp.ne.s32.totalorder %s112, %s114
    %p118 = scmp.eq.s32.totalorder %s19, 0
    %p119 = por %p117, %p118
    %p120 = scmp.ne.s32.totalorder %s112, %s114
    %p121 = scmp.eq.s32.totalorder %s24, 3
    %p122 = por %p120, %p121
    %p123 = scmp.ne.s32.totalorder %s114, %s115
    %p124 = scmp.eq.s32.totalorder %s24, 0
    %p125 = por %p123, %p124
    %p126 = scmp.ne.s32.totalorder %s114, %s115
    %p127 = scmp.eq.s32.totalorder %s25, 3
    %p128 = por %p126, %p127
    %p130 = scmp.ne.s32.totalorder %s115, %s129
    %p131 = scmp.eq.s32.totalorder %s25, 0
    %p132 = por %p130, %p131
    %s134 = sadd.s32 %s133, 1
    %p137 = scmp.eq.s32.totalorder %s19, 3
    %p138 = scmp.ne.s32.totalorder %s133, %s135
    %p139 = scmp.eq.s32.totalorder %s19, 0
    %p140 = por %p138, %p139
    %p141 = scmp.ne.s32.totalorder %s133, %s135
    %p142 = scmp.eq.s32.totalorder %s24, 3
    %p143 = por %p141, %p142
    %p144 = scmp.ne.s32.totalorder %s135, %s136
    %p145 = scmp.eq.s32.totalorder %s24, 0
    %p146 = por %p144, %p145
    %p147 = scmp.ne.s32.totalorder %s135, %s136
    %p148 = scmp.eq.s32.totalorder %s25, 3
    %p149 = por %p147, %p148
    %p151 = scmp.ne.s32.totalorder %s136, %s150
    %p152 = scmp.eq.s32.totalorder %s25, 0
    %p153 = por %p151, %p152
    %s154 = ssub.s32 %s27, %s34
    %p155 = scmp.eq.s32.totalorder %s154, 0
    %s157 = sadd.s32 %s156, 1
    %s158 = scalar_select %p155, %s156, %s157
    %p161 = pneg %p155
    %p162 = scmp.eq.s32.totalorder %s19, 3
    %p163 = por %p161, %p162
    %p164 = scmp.ne.s32.totalorder %s156, %s159
    %p165 = scmp.eq.s32.totalorder %s19, 0
    %p166 = por %p164, %p165
    %p167 = scmp.ne.s32.totalorder %s156, %s159
    %p168 = scmp.eq.s32.totalorder %s24, 3
    %p169 = por %p167, %p168
    %p170 = scmp.ne.s32.totalorder %s159, %s160
    %p171 = scmp.eq.s32.totalorder %s24, 0
    %p172 = por %p170, %p171
    %p173 = scmp.ne.s32.totalorder %s159, %s160
    %p174 = scmp.eq.s32.totalorder %s25, 3
    %p175 = por %p173, %p174
    %p177 = scmp.ne.s32.totalorder %s160, %s176
    %p178 = scmp.eq.s32.totalorder %s25, 0
    %p179 = por %p177, %p178
    %s180 = ssub.s32 %s27, %s34
    %p181 = scmp.eq.s32.totalorder %s180, 0
    %s183 = sadd.s32 %s182, 1
    %s184 = scalar_select %p181, %s182, %s183
    %p187 = pneg %p181
    %p188 = scmp.eq.s32.totalorder %s19, 3
    %p189 = por %p187, %p188
    %p190 = scmp.ne.s32.totalorder %s182, %s185
    %p191 = scmp.eq.s32.totalorder %s19, 0
    %p192 = por %p190, %p191
    %p193 = scmp.ne.s32.totalorder %s182, %s185
    %p194 = scmp.eq.s32.totalorder %s24, 3
    %p195 = por %p193, %p194
    %p196 = scmp.ne.s32.totalorder %s185, %s186
    %p197 = scmp.eq.s32.totalorder %s24, 0
    %p198 = por %p196, %p197
    %p199 = scmp.ne.s32.totalorder %s185, %s186
    %p200 = scmp.eq.s32.totalorder %s25, 3
    %p201 = por %p199, %p200
    %p203 = scmp.ne.s32.totalorder %s186, %s202
    %p204 = scmp.eq.s32.totalorder %s25, 0
    %p205 = por %p203, %p204
    %s206 = ssub.s32 %s27, %s34
    %p207 = scmp.eq.s32.totalorder %s206, 0
    %s209 = sadd.s32 %s208, 1
    %s210 = scalar_select %p207, %s208, %s209
    %p213 = pneg %p207
    %p214 = scmp.eq.s32.totalorder %s19, 3
    %p215 = por %p213, %p214
    %p216 = scmp.ne.s32.totalorder %s208, %s211
    %p217 = scmp.eq.s32.totalorder %s19, 0
    %p218 = por %p216, %p217
    %p219 = scmp.ne.s32.totalorder %s208, %s211
    %p220 = scmp.eq.s32.totalorder %s24, 3
    %p221 = por %p219, %p220
    %p222 = scmp.ne.s32.totalorder %s211, %s212
    %p223 = scmp.eq.s32.totalorder %s24, 0
    %p224 = por %p222, %p223
    %p225 = scmp.ne.s32.totalorder %s211, %s212
    %p226 = scmp.eq.s32.totalorder %s25, 3
    %p227 = por %p225, %p226
    %p229 = scmp.ne.s32.totalorder %s212, %s228
    %p230 = scmp.eq.s32.totalorder %s25, 0
    %p231 = por %p229, %p230
    %s232 = ssub.s32 %s27, %s34
    %p233 = scmp.eq.s32.totalorder %s232, 0
    %s235 = sadd.s32 %s234, 1
    %s236 = scalar_select %p233, %s234, %s235
    %p239 = pneg %p233
    %p240 = scmp.eq.s32.totalorder %s19, 3
    %p241 = por %p239, %p240
    %p242 = scmp.ne.s32.totalorder %s234, %s237
    %p243 = scmp.eq.s32.totalorder %s19, 0
    %p244 = por %p242, %p243
    %p245 = scmp.ne.s32.totalorder %s234, %s237
    %p246 = scmp.eq.s32.totalorder %s24, 3
    %p247 = por %p245, %p246
    %p248 = scmp.ne.s32.totalorder %s237, %s238
    %p249 = scmp.eq.s32.totalorder %s24, 0
    %p250 = por %p248, %p249
    %p251 = scmp.ne.s32.totalorder %s237, %s238
    %p252 = scmp.eq.s32.totalorder %s25, 3
    %p253 = por %p251, %p252
    %p255 = scmp.ne.s32.totalorder %s238, %s254
    %p256 = scmp.eq.s32.totalorder %s25, 0
    %p257 = por %p255, %p256
    %s258 = ssub.s32 %s27, %s34
    %p259 = scmp.eq.s32.totalorder %s258, 0
    %s261 = sadd.s32 %s260, 1
    %s262 = scalar_select %p259, %s260, %s261
    %p265 = pneg %p259
    %p266 = scmp.eq.s32.totalorder %s19, 3
    %p267 = por %p265, %p266
    %p268 = scmp.ne.s32.totalorder %s260, %s263
    %p269 = scmp.eq.s32.totalorder %s19, 0
    %p270 = por %p268, %p269
    %p271 = scmp.ne.s32.totalorder %s260, %s263
    %p272 = scmp.eq.s32.totalorder %s24, 3
    %p273 = por %p271, %p272
    %p274 = scmp.ne.s32.totalorder %s263, %s264
    %p275 = scmp.eq.s32.totalorder %s24, 0
    %p276 = por %p274, %p275
    %p277 = scmp.ne.s32.totalorder %s263, %s264
    %p278 = scmp.eq.s32.totalorder %s25, 3
    %p279 = por %p277, %p278
    %p281 = scmp.ne.s32.totalorder %s264, %s280
    %p282 = scmp.eq.s32.totalorder %s25, 0
    %p283 = por %p281, %p282
    %s284 = ssub.s32 %s27, %s34
    %p285 = scmp.eq.s32.totalorder %s284, 0
    %s287 = sadd.s32 %s286, 1
    %s288 = scalar_select %p285, %s286, %s287
    %p291 = pneg %p285
    %p292 = scmp.eq.s32.totalorder %s19, 3
    %p293 = por %p291, %p292
    %p294 = scmp.ne.s32.totalorder %s286, %s289
    %p295 = scmp.eq.s32.totalorder %s19, 0
    %p296 = por %p294, %p295
    %p297 = scmp.ne.s32.totalorder %s286, %s289
    %p298 = scmp.eq.s32.totalorder %s24, 3
    %p299 = por %p297, %p298
    %p300 = scmp.ne.s32.totalorder %s289, %s290
    %p301 = scmp.eq.s32.totalorder %s24, 0
    %p302 = por %p300, %p301
    %p303 = scmp.ne.s32.totalorder %s289, %s290
    %p304 = scmp.eq.s32.totalorder %s25, 3
    %p305 = por %p303, %p304
    %p307 = scmp.ne.s32.totalorder %s290, %s306
    %p308 = scmp.eq.s32.totalorder %s25, 0
    %p309 = por %p307, %p308
    %s310 = ssub.s32 %s27, %s34
    %p311 = scmp.eq.s32.totalorder %s310, 0
    %s313 = sadd.s32 %s312, 1
    %s314 = scalar_select %p311, %s312, %s313
    %p317 = pneg %p311
    %p318 = scmp.eq.s32.totalorder %s19, 3
    %p319 = por %p317, %p318
    %p320 = scmp.ne.s32.totalorder %s312, %s315
    %p321 = scmp.eq.s32.totalorder %s19, 0
    %p322 = por %p320, %p321
    %p323 = scmp.ne.s32.totalorder %s312, %s315
    %p324 = scmp.eq.s32.totalorder %s24, 3
    %p325 = por %p323, %p324
    %p326 = scmp.ne.s32.totalorder %s315, %s316
    %p327 = scmp.eq.s32.totalorder %s24, 0
    %p328 = por %p326, %p327
    %p329 = scmp.ne.s32.totalorder %s315, %s316
    %p330 = scmp.eq.s32.totalorder %s25, 3
    %p331 = por %p329, %p330
    %p333 = scmp.ne.s32.totalorder %s316, %s332
    %p334 = scmp.eq.s32.totalorder %s25, 0
    %p335 = por %p333, %p334
    %s336 = ssub.s32 %s27, %s34
    %p337 = scmp.eq.s32.totalorder %s336, 0
    %s339 = sadd.s32 %s338, 1
    %s340 = scalar_select %p337, %s338, %s339
    %p343 = pneg %p337
    %p344 = scmp.eq.s32.totalorder %s19, 3
    %p345 = por %p343, %p344
    %p346 = scmp.ne.s32.totalorder %s338, %s341
    %p347 = scmp.eq.s32.totalorder %s19, 0
    %p348 = por %p346, %p347
    %p349 = scmp.ne.s32.totalorder %s338, %s341
    %p350 = scmp.eq.s32.totalorder %s24, 3
    %p351 = por %p349, %p350
    %p352 = scmp.ne.s32.totalorder %s341, %s342
    %p353 = scmp.eq.s32.totalorder %s24, 0
    %p354 = por %p352, %p353
    %p355 = scmp.ne.s32.totalorder %s341, %s342
    %p356 = scmp.eq.s32.totalorder %s25, 3
    %p357 = por %p355, %p356
    %p359 = scmp.ne.s32.totalorder %s342, %s358
    %p360 = scmp.eq.s32.totalorder %s25, 0
    %p361 = por %p359, %p360
    %s362 = ssub.s32 %s26, %s38
    %p363 = scmp.eq.s32.totalorder %s362, 0
    %s365 = sadd.s32 %s364, 1
    %s366 = scalar_select %p363, %s364, %s365
    %p369 = pneg %p363
    %p370 = scmp.eq.s32.totalorder %s19, 3
    %p371 = por %p369, %p370
    %p372 = scmp.ne.s32.totalorder %s364, %s367
    %p373 = scmp.eq.s32.totalorder %s19, 0
    %p374 = por %p372, %p373
    %p375 = scmp.ne.s32.totalorder %s364, %s367
    %p376 = scmp.eq.s32.totalorder %s24, 3
    %p377 = por %p375, %p376
    %p378 = scmp.ne.s32.totalorder %s367, %s368
    %p379 = scmp.eq.s32.totalorder %s24, 0
    %p380 = por %p378, %p379
    %p381 = scmp.ne.s32.totalorder %s367, %s368
    %p382 = scmp.eq.s32.totalorder %s25, 3
    %p383 = por %p381, %p382
    %p385 = scmp.ne.s32.totalorder %s368, %s384
    %p386 = scmp.eq.s32.totalorder %s25, 0
    %p387 = por %p385, %p386
    %p388 = scmp.le.s32.totalorder 1, %s19
    %p389 = scmp.lt.s32.totalorder %s19, 5
    %p390 = pnand %p388, %p389
    %p391 = pneg %p390
    // Predicated region
    $region9: #{modern_transformer_lm_forward.2} parent=5 // pred_check
      _
    $region10: #{modern_transformer_lm_forward.2} parent=5 // pred_check_branch
      %393 = sbr.rel (%p390) target = $region12
    $region11: #{modern_transformer_lm_forward.2} parent=5 // pred_region
      %s394 = ssub.s32 %s19, 1
      // Predicated region
      $region13: #{modern_transformer_lm_forward.2} parent=11 // pred_check
        %p395 = pneg %p104
      $region14: #{modern_transformer_lm_forward.2} parent=11 // pred_check_branch
        %397 = sbr.rel (%p395) target = $region16
      $region15: #{modern_transformer_lm_forward.2} parent=11 // pred_region
        _
      $region16: #{modern_transformer_lm_forward.2} parent=11 // pred_fallthru
        _
      // Predicated region
      $region17: #{modern_transformer_lm_forward.2} parent=11 // pred_check
        %p398 = pneg %p125
      $region18: #{modern_transformer_lm_forward.2} parent=11 // pred_check_branch
        %400 = sbr.rel (%p398) target = $region20
      $region19: #{modern_transformer_lm_forward.2} parent=11 // pred_region
        _
      $region20: #{modern_transformer_lm_forward.2} parent=11 // pred_fallthru
        _
      // Predicated region
      $region21: #{modern_transformer_lm_forward.2} parent=11 // pred_check
        %p401 = pneg %p146
      $region22: #{modern_transformer_lm_forward.2} parent=11 // pred_check_branch
        %403 = sbr.rel (%p401) target = $region24
      $region23: #{modern_transformer_lm_forward.2} parent=11 // pred_region
        _
      $region24: #{modern_transformer_lm_forward.2} parent=11 // pred_fallthru
        _
    $region12: #{modern_transformer_lm_forward.2} parent=5 // pred_fallthru
      _
    %p404 = scmp.lt.s32.totalorder %s19, 4
    // Predicated region
    $region25: #{modern_transformer_lm_forward.2} parent=5 // pred_check
      %p405 = pneg %p404
    $region26: #{modern_transformer_lm_forward.2} parent=5 // pred_check_branch
      %407 = sbr.rel (%p405) target = $region28
    $region27: #{modern_transformer_lm_forward.2} parent=5 // pred_region
      // Predicated region
      $region29: #{modern_transformer_lm_forward.2} parent=27 // pred_check
        %p408 = pneg %p51
      $region30: #{modern_transformer_lm_forward.2} parent=27 // pred_check_branch
        %410 = sbr.rel (%p408) target = $region32
      $region31: #{modern_transformer_lm_forward.2} parent=27 // pred_region
        %p411 = scmp.lt.s32.totalorder %s26, 1
        %s412 = scalar_select %p411, %s26, 1
        %s413 = smul.addr %s412, 2
        %s414 = smul.addr %s413, 8
        %s415 = scalar_lea.vmem %s0, %s414
      $region32: #{modern_transformer_lm_forward.2} parent=27 // pred_fallthru
        _
      // Predicated region
      $region33: #{modern_transformer_lm_forward.2} parent=27 // pred_check
        %p416 = pneg %p77
      $region34: #{modern_transformer_lm_forward.2} parent=27 // pred_check_branch
        %418 = sbr.rel (%p416) target = $region36
      $region35: #{modern_transformer_lm_forward.2} parent=27 // pred_region
        %p419 = scmp.lt.s32.totalorder %s26, 1
        %s420 = scalar_select %p419, %s26, 1
        %s421 = scalar_lea.vmem %s1, %s420
      $region36: #{modern_transformer_lm_forward.2} parent=27 // pred_fallthru
        _
      // Predicated region
      $region37: #{modern_transformer_lm_forward.2} parent=27 // pred_check
        %p422 = pneg %p166
      $region38: #{modern_transformer_lm_forward.2} parent=27 // pred_check_branch
        %424 = sbr.rel (%p422) target = $region40
      $region39: #{modern_transformer_lm_forward.2} parent=27 // pred_region
        %p425 = scmp.lt.s32.totalorder %s27, 1
        %s426 = scalar_select %p425, %s27, 1
        %s427 = scalar_lea.vmem %s5, %s426
      $region40: #{modern_transformer_lm_forward.2} parent=27 // pred_fallthru
        _
      // Predicated region
      $region41: #{modern_transformer_lm_forward.2} parent=27 // pred_check
        %p428 = pneg %p192
      $region42: #{modern_transformer_lm_forward.2} parent=27 // pred_check_branch
        %430 = sbr.rel (%p428) target = $region44
      $region43: #{modern_transformer_lm_forward.2} parent=27 // pred_region
        %p431 = scmp.lt.s32.totalorder %s27, 1
        %s432 = scalar_select %p431, %s27, 1
        %s433 = smul.addr %s432, 16
        %s434 = smul.addr %s433, 4
        %s435 = scalar_lea.vmem %s6, %s434
      $region44: #{modern_transformer_lm_forward.2} parent=27 // pred_fallthru
        _
      // Predicated region
      $region45: #{modern_transformer_lm_forward.2} parent=27 // pred_check
        %p436 = pneg %p218
      $region46: #{modern_transformer_lm_forward.2} parent=27 // pred_check_branch
        %438 = sbr.rel (%p436) target = $region48
      $region47: #{modern_transformer_lm_forward.2} parent=27 // pred_region
        %p439 = scmp.lt.s32.totalorder %s27, 1
        %s440 = scalar_select %p439, %s27, 1
        %s441 = smul.addr %s440, 8
        %s442 = smul.addr %s441, 4
        %s443 = scalar_lea.vmem %s7, %s442
      $region48: #{modern_transformer_lm_forward.2} parent=27 // pred_fallthru
        _
      // Predicated region
      $region49: #{modern_transformer_lm_forward.2} parent=27 // pred_check
        %p444 = pneg %p244
      $region50: #{modern_transformer_lm_forward.2} parent=27 // pred_check_branch
        %446 = sbr.rel (%p444) target = $region52
      $region51: #{modern_transformer_lm_forward.2} parent=27 // pred_region
        %p447 = scmp.lt.s32.totalorder %s27, 1
        %s448 = scalar_select %p447, %s27, 1
        %s449 = scalar_lea.vmem %s8, %s448
      $region52: #{modern_transformer_lm_forward.2} parent=27 // pred_fallthru
        _
      // Predicated region
      $region53: #{modern_transformer_lm_forward.2} parent=27 // pred_check
        %p450 = pneg %p270
      $region54: #{modern_transformer_lm_forward.2} parent=27 // pred_check_branch
        %452 = sbr.rel (%p450) target = $region56
      $region55: #{modern_transformer_lm_forward.2} parent=27 // pred_region
        %p453 = scmp.lt.s32.totalorder %s27, 1
        %s454 = scalar_select %p453, %s27, 1
        %s455 = smul.addr %s454, 16
        %s456 = smul.addr %s455, 4
        %s457 = scalar_lea.vmem %s9, %s456
      $region56: #{modern_transformer_lm_forward.2} parent=27 // pred_fallthru
        _
      // Predicated region
      $region57: #{modern_transformer_lm_forward.2} parent=27 // pred_check
        %p458 = pneg %p296
      $region58: #{modern_transformer_lm_forward.2} parent=27 // pred_check_branch
        %460 = sbr.rel (%p458) target = $region60
      $region59: #{modern_transformer_lm_forward.2} parent=27 // pred_region
        %p461 = scmp.lt.s32.totalorder %s27, 1
        %s462 = scalar_select %p461, %s27, 1
        %s463 = smul.addr %s462, 2
        %s464 = scalar_lea.vmem %s10, %s463
      $region60: #{modern_transformer_lm_forward.2} parent=27 // pred_fallthru
        _
      // Predicated region
      $region61: #{modern_transformer_lm_forward.2} parent=27 // pred_check
        %p465 = pneg %p322
      $region62: #{modern_transformer_lm_forward.2} parent=27 // pred_check_branch
        %467 = sbr.rel (%p465) target = $region64
      $region63: #{modern_transformer_lm_forward.2} parent=27 // pred_region
        %p468 = scmp.lt.s32.totalorder %s27, 1
        %s469 = scalar_select %p468, %s27, 1
        %s470 = smul.addr %s469, 16
        %s471 = smul.addr %s470, 4
        %s472 = scalar_lea.vmem %s11, %s471
      $region64: #{modern_transformer_lm_forward.2} parent=27 // pred_fallthru
        _
      // Predicated region
      $region65: #{modern_transformer_lm_forward.2} parent=27 // pred_check
        %p473 = pneg %p348
      $region66: #{modern_transformer_lm_forward.2} parent=27 // pred_check_branch
        %475 = sbr.rel (%p473) target = $region68
      $region67: #{modern_transformer_lm_forward.2} parent=27 // pred_region
        %p476 = scmp.lt.s32.totalorder %s27, 1
        %s477 = scalar_select %p476, %s27, 1
        %s478 = scalar_lea.vmem %s12, %s477
      $region68: #{modern_transformer_lm_forward.2} parent=27 // pred_fallthru
        _
    $region28: #{modern_transformer_lm_forward.2} parent=5 // pred_fallthru
      _
    %p479 = scmp.le.s32.totalorder 1, %s19
    %p480 = scmp.lt.s32.totalorder %s19, 5
    %p481 = pnand %p479, %p480
    %p482 = pneg %p481
    // Predicated region
    $region69: #{modern_transformer_lm_forward.2} parent=5 // pred_check
      _
    $region70: #{modern_transformer_lm_forward.2} parent=5 // pred_check_branch
      %484 = sbr.rel (%p481) target = $region72
    $region71: #{modern_transformer_lm_forward.2} parent=5 // pred_region
      %s485 = ssub.s32 %s19, 1
      %p486 = scmp.lt.s32.totalorder %s28, 1
      %s487 = scalar_select %p486, %s28, 1
      %s488 = smul.addr %s487, 2
      %s489 = smul.addr %s488, 8
      %s490 = scalar_lea.vmem %s0, %s489
      %p491 = pneg %p57
      %p492 = pneg %p54
      %p493 = scmp.lt.s32.totalorder %s28, 1
      %s494 = scalar_select %p493, %s28, 1
      %s495 = scalar_lea.vmem %s1, %s494
      %p496 = pneg %p83
      %p497 = pneg %p80
      %p498 = pneg %p104
      %p499 = pneg %p101
      %p500 = pneg %p125
      %p501 = pneg %p122
      %p502 = pneg %p146
      %p503 = pneg %p143
      %p504 = scmp.lt.s32.totalorder %s29, 1
      %s505 = scalar_select %p504, %s29, 1
      %s506 = scalar_lea.vmem %s5, %s505
      %p507 = pneg %p172
      %p508 = pneg %p169
      %p509 = scmp.lt.s32.totalorder %s29, 1
      %s510 = scalar_select %p509, %s29, 1
      %s511 = smul.addr %s510, 16
      %s512 = smul.addr %s511, 4
      %s513 = scalar_lea.vmem %s6, %s512
      %p514 = pneg %p198
      %p515 = pneg %p195
      %p516 = scmp.lt.s32.totalorder %s29, 1
      %s517 = scalar_select %p516, %s29, 1
      %s518 = smul.addr %s517, 8
      %s519 = smul.addr %s518, 4
      %s520 = scalar_lea.vmem %s7, %s519
      %p521 = pneg %p224
      %p522 = pneg %p221
      %p523 = scmp.lt.s32.totalorder %s29, 1
      %s524 = scalar_select %p523, %s29, 1
      %s525 = scalar_lea.vmem %s8, %s524
      %p526 = pneg %p250
      %p527 = pneg %p247
      %p528 = scmp.lt.s32.totalorder %s29, 1
      %s529 = scalar_select %p528, %s29, 1
      %s530 = smul.addr %s529, 16
      %s531 = smul.addr %s530, 4
      %s532 = scalar_lea.vmem %s9, %s531
      %p533 = pneg %p276
      %p534 = pneg %p273
      %p535 = scmp.lt.s32.totalorder %s29, 1
      %s536 = scalar_select %p535, %s29, 1
      %s537 = smul.addr %s536, 2
      %s538 = scalar_lea.vmem %s10, %s537
      %p539 = pneg %p302
      %p540 = pneg %p299
      %p541 = scmp.lt.s32.totalorder %s29, 1
      %s542 = scalar_select %p541, %s29, 1
      %s543 = smul.addr %s542, 16
      %s544 = smul.addr %s543, 4
      %s545 = scalar_lea.vmem %s11, %s544
      %p546 = pneg %p328
      %p547 = pneg %p325
      %p548 = scmp.lt.s32.totalorder %s29, 1
      %s549 = scalar_select %p548, %s29, 1
      %s550 = scalar_lea.vmem %s12, %s549
      %p551 = pneg %p354
      %p552 = pneg %p351
      %p553 = pneg %p380
      %p554 = pneg %p377
      %p555 = scmp.lt.s32.totalorder %s28, 1
      %s556 = scalar_select %p555, %s28, 1
      %s557 = smul.addr %s556, 2
      %s558 = smul.addr %s557, 8
      %s559 = scalar_lea.vmem %s13, %s558
      %p560 = scmp.lt.s32.totalorder %s28, 1
      %s561 = scalar_select %p560, %s28, 1
      %s562 = smul.addr %s561, 2
      %s563 = smul.addr %s562, 8
      %s564 = scalar_lea.vmem %s0, %s563
      %p565 = scmp.lt.s32.totalorder %s28, 1
      %s566 = scalar_select %p565, %s28, 1
      %s567 = scalar_lea.vmem %s1, %s566
      %p568 = scmp.lt.s32.totalorder %s29, 1
      %s569 = scalar_select %p568, %s29, 1
      %s570 = scalar_lea.vmem %s5, %s569
      %p571 = scmp.lt.s32.totalorder %s29, 1
      %s572 = scalar_select %p571, %s29, 1
      %s573 = smul.addr %s572, 16
      %s574 = smul.addr %s573, 4
      %s575 = scalar_lea.vmem %s6, %s574
      %p576 = scmp.lt.s32.totalorder %s29, 1
      %s577 = scalar_select %p576, %s29, 1
      %s578 = smul.addr %s577, 8
      %s579 = smul.addr %s578, 4
      %s580 = scalar_lea.vmem %s7, %s579
      %p581 = scmp.lt.s32.totalorder %s29, 1
      %s582 = scalar_select %p581, %s29, 1
      %s583 = scalar_lea.vmem %s8, %s582
      %p584 = scmp.lt.s32.totalorder %s29, 1
      %s585 = scalar_select %p584, %s29, 1
      %s586 = smul.addr %s585, 16
      %s587 = smul.addr %s586, 4
      %s588 = scalar_lea.vmem %s9, %s587
      %p589 = scmp.lt.s32.totalorder %s29, 1
      %s590 = scalar_select %p589, %s29, 1
      %s591 = smul.addr %s590, 2
      %s592 = scalar_lea.vmem %s10, %s591
      %p593 = scmp.lt.s32.totalorder %s29, 1
      %s594 = scalar_select %p593, %s29, 1
      %s595 = smul.addr %s594, 16
      %s596 = smul.addr %s595, 4
      %s597 = scalar_lea.vmem %s11, %s596
      %p598 = scmp.lt.s32.totalorder %s29, 1
      %s599 = scalar_select %p598, %s29, 1
      %s600 = scalar_lea.vmem %s12, %s599
      %p601 = scmp.lt.s32.totalorder %s28, 1
      %s602 = scalar_select %p601, %s28, 1
      %s603 = smul.addr %s602, 2
      %s604 = smul.addr %s603, 8
      %s605 = scalar_lea.vmem %s13, %s604
      %p607 = scmp.eq.s32.totalorder %s29, 0
      // Predicated region
      $region73: #{modern_transformer_lm_forward.2} parent=71 // pred_check
        %p608 = pneg %p607
      $region74: #{modern_transformer_lm_forward.2} parent=71 // pred_check_branch
        %610 = sbr.rel (%p608) target = $region76
      $region75: #{modern_transformer_lm_forward.2} parent=71 // pred_region
        %v611 = vld [vmem:[%s564] sm:$0xff]
        %v612 = vld [vmem:[%s564 + $0x8] sm:$0xff]
        %vm613 = vcmask 523264
        %614 = vst.msk [vmem:[%s605] sm:$0xff] %vm613, %v611
        %615 = vst.msk [vmem:[%s605 + $0x8] sm:$0xff] %vm613, %v612
      $region76: #{modern_transformer_lm_forward.2} parent=71 // pred_fallthru
        _
      %v616 = vld [vmem:[%s605] sm:$0xff]
      %v617 = vld [vmem:[%s605 + $0x8] sm:$0xff]
      %v618 = vld [vmem:[%s570] sm:$0x1]
      %v619 = vmul.f32 %v616, %v616
      %v620 = vmul.f32 %v617, %v617
      %vm621 = vcmask 523264
      %v622 = vsel %vm621, %v619, 0.0
      %623 = vadd.xlane.f32.xlu0 %v622
      %v624 = vpop.xlane.xlu0 %623
      %v625 = vsel %vm621, %v620, 0.0
      %626 = vadd.xlane.f32.xlu0 %v625
      %v627 = vpop.xlane.xlu0 %626
      %v628 = vrcp.pop 64.0
      %v629 = vmul.f32 64.0, %v628
      %v630 = vsub.f32 1.0, %v629
      %v631 = vmul.f32 %v628, %v630
      %v632 = vadd.f32 %v628, %v631
      %vm633 = vweird.f32 %v628
      %v634 = vsel %vm633, %v628, %v632
      %v635 = vmul.f32 %v624, %v634
      %v636 = vmul.f32 %v627, %v634
      %v637 = vadd.f32 %v635, 0.0001
      %v638 = vadd.f32 %v636, 0.0001
      %v639 = vrsqrt.pop %v637
      %v640 = vmul.f32 %v639, %v637
      %v641 = vmul.f32 %v640, %v639
      %v642 = vmul.f32 0.5, %v641
      %v643 = vsub.f32 1.5, %v642
      %v644 = vmul.f32 %v639, %v643
      %vm645 = vweird.f32 %v637
      %vm646 = vweird.f32 %v639
      %vm647 = vmor %vm645, %vm646
      %v648 = vsel %vm647, %v639, %v644
      %v649 = vrsqrt.pop %v638
      %v650 = vmul.f32 %v649, %v638
      %v651 = vmul.f32 %v650, %v649
      %v652 = vmul.f32 0.5, %v651
      %v653 = vsub.f32 1.5, %v652
      %v654 = vmul.f32 %v649, %v653
      %vm655 = vweird.f32 %v638
      %vm656 = vweird.f32 %v649
      %vm657 = vmor %vm655, %vm656
      %v658 = vsel %vm657, %v649, %v654
      %v660 = vperm.slane %v618, 0
      %v662 = vmul.f32 %v660, %v648
      %v663 = vmul.f32 %v660, %v658
      %v664 = vmul.f32 %v616, %v662
      %v665 = vmul.f32 %v617, %v663
      %v666 = vpack.c.bf16 %v665, %v664
      %v667 = vld [vmem:[%s575] sm:$0xff]
      %v668 = vld [vmem:[%s575 + $0x8] sm:$0xff]
      %v669 = vld [vmem:[%s575 + $0x10] sm:$0xff]
      %v670 = vld [vmem:[%s575 + $0x18] sm:$0xff]
      %v671 = vld [vmem:[%s575 + $0x20] sm:$0xff]
      %v672 = vld [vmem:[%s575 + $0x28] sm:$0xff]
      %v673 = vld [vmem:[%s575 + $0x30] sm:$0xff]
      %v674 = vld [vmem:[%s575 + $0x38] sm:$0xff]
      %v683 = vunpack.c.l.b16 %v667
      %v684 = vunpack.c.h.b16 %v667
      %v685 = vunpack.c.l.b16 %v668
      %v686 = vunpack.c.h.b16 %v668
      %v687 = vunpack.c.l.b16 %v669
      %v688 = vunpack.c.h.b16 %v669
      %v689 = vunpack.c.l.b16 %v670
      %v690 = vunpack.c.h.b16 %v670
      %v691 = vunpack.c.l.b16 %v671
      %v692 = vunpack.c.h.b16 %v671
      %v693 = vunpack.c.l.b16 %v672
      %v694 = vunpack.c.h.b16 %v672
      %v695 = vunpack.c.l.b16 %v673
      %v696 = vunpack.c.h.b16 %v673
      %v697 = vunpack.c.l.b16 %v674
      %v698 = vunpack.c.h.b16 %v674
      %v699 = vpack.c.b16 %v685, %v683
      %v700 = vpack.c.b16 %v686, %v684
      %v701 = vpack.c.b16 %v689, %v687
      %v702 = vpack.c.b16 %v690, %v688
      %v703 = vpack.c.b16 %v693, %v691
      %v704 = vpack.c.b16 %v694, %v692
      %v705 = vpack.c.b16 %v697, %v695
      %v706 = vpack.c.b16 %v698, %v696
      %v716 = vsel %vm621, %v666, 0
      %718 = vmatpush.bf16.msra.mxu0 0
      %719 = vmatpush.bf16.msra.mxu0 0
      %720 = vmatpush.bf16.msra.mxu0 0
      %721 = vmatpush.bf16.msra.mxu0 0
      %722 = vmatpush.bf16.msra.mxu0 %v705
      %723 = vmatpush.bf16.msra.mxu0 %v703
      %724 = vmatpush.bf16.msra.mxu0 %v701
      %725 = vmatpush.bf16.msra.mxu0 %v699
      %726 = vmatmul.bf16.gmra.mxu0 %v716
      %v727 = vpop.f32.mrf.mxu0
      %v728 = vadd.f32 0.0, %v727
      %v729 = vpop.f32.mrf.mxu0
      %v730 = vadd.f32 0.0, %v729
      %731 = vdwg.mxu0
      %732 = vmatpush.bf16.msra.mxu0 0
      %733 = vmatpush.bf16.msra.mxu0 0
      %734 = vmatpush.bf16.msra.mxu0 0
      %735 = vmatpush.bf16.msra.mxu0 0
      %736 = vmatpush.bf16.msra.mxu0 %v706
      %737 = vmatpush.bf16.msra.mxu0 %v704
      %738 = vmatpush.bf16.msra.mxu0 %v702
      %739 = vmatpush.bf16.msra.mxu0 %v700
      %740 = vmatmul.bf16.gmra.mxu0 %v716
      %v741 = vpop.f32.mrf.mxu0
      %v742 = vadd.f32 0.0, %v741
      %v743 = vpop.f32.mrf.mxu0
      %v744 = vadd.f32 0.0, %v743
      %745 = vdwg.mxu0
      %v746 = vld [vmem:[%s2] sm:$0xff]
      %v747 = vld [vmem:[%s2 + $0x8] sm:$0xff]
      %v748 = vld [vmem:[%s3] sm:$0xff]
      %v749 = vld [vmem:[%s3 + $0x8] sm:$0xff]
      %v750 = vld [vmem:[%s4] sm:$0xf]
      %v751 = vld [vmem:[%s4 + $0x4] sm:$0xf]
      %v752 = vld [vmem:[%s4 + $0x8] sm:$0xf]
      %v753 = vld [vmem:[%s4 + $0xc] sm:$0xf]
      %v754 = vld [vmem:[%s4 + $0x10] sm:$0xf]
      %v755 = vld [vmem:[%s4 + $0x14] sm:$0xf]
      %v756 = vld [vmem:[%s4 + $0x18] sm:$0xf]
      %v757 = vld [vmem:[%s4 + $0x1c] sm:$0xf]
      %v758 = vpack.c.bf16 %v730, %v728
      %v767 = vunpack.c.l.b16 %v750
      %v768 = vunpack.c.l.b16 %v751
      %v769 = vunpack.c.l.b16 %v752
      %v770 = vunpack.c.l.b16 %v753
      %v771 = vunpack.c.l.b16 %v754
      %v772 = vunpack.c.l.b16 %v755
      %v773 = vunpack.c.l.b16 %v756
      %v774 = vunpack.c.l.b16 %v757
      %v775 = vpack.c.b16 %v768, %v767
      %v776 = vpack.c.b16 %v770, %v769
      %v777 = vpack.c.b16 %v772, %v771
      %v778 = vpack.c.b16 %v774, %v773
      %v784 = vsel %vm621, %v758, 0
      %786 = vmatpush.bf16.msra.mxu0 0
      %787 = vmatpush.bf16.msra.mxu0 0
      %788 = vmatpush.bf16.msra.mxu0 0
      %789 = vmatpush.bf16.msra.mxu0 0
      %790 = vmatpush.bf16.msra.mxu0 %v778
      %791 = vmatpush.bf16.msra.mxu0 %v777
      %792 = vmatpush.bf16.msra.mxu0 %v776
      %793 = vmatpush.bf16.msra.mxu0 %v775
      %794 = vmatmul.bf16.gmra.mxu0 %v784
      %v795 = vpop.f32.mrf.mxu0
      %v796 = vadd.f32 0.0, %v795
      %v797 = vpop.f32.mrf.mxu0
      %v798 = vadd.f32 0.0, %v797
      %799 = vdwg.mxu0
      %v800 = vmul.f32 %v728, %v746
      %v801 = vmul.f32 %v730, %v747
      %v802 = vmul.f32 %v796, %v748
      %v803 = vmul.f32 %v798, %v749
      %v804 = vadd.f32 %v800, %v802
      %v805 = vadd.f32 %v801, %v803
      %807 = vrot.lane.b32.xlu0 %v758, 64
      %v808 = vpop.permute.xlu0 %807
      %v810 = vsel %vm621, %v808, 0
      %812 = vmatpush.bf16.msra.mxu0 0
      %813 = vmatpush.bf16.msra.mxu0 0
      %814 = vmatpush.bf16.msra.mxu0 0
      %815 = vmatpush.bf16.msra.mxu0 0
      %816 = vmatpush.bf16.msra.mxu0 %v778
      %817 = vmatpush.bf16.msra.mxu0 %v777
      %818 = vmatpush.bf16.msra.mxu0 %v776
      %819 = vmatpush.bf16.msra.mxu0 %v775
      %820 = vmatmul.bf16.gmra.mxu0 %v810
      %v821 = vpop.f32.mrf.mxu0
      %v822 = vadd.f32 0.0, %v821
      %v823 = vpop.f32.mrf.mxu0
      %v824 = vadd.f32 0.0, %v823
      %825 = vdwg.mxu0
      %828 = vrot.lane.b32.xlu0 %v746, 64
      %v829 = vpop.permute.xlu0 %828
      %830 = vrot.lane.b32.xlu0 %v747, 64
      %v831 = vpop.permute.xlu0 %830
      %v834 = vmul.f32 %v728, %v829
      %v835 = vmul.f32 %v730, %v831
      %v836 = vmul.f32 %v822, %v748
      %v837 = vmul.f32 %v824, %v749
      %840 = vrot.lane.b32.xlu0 %v836, 64
      %v841 = vpop.permute.xlu0 %840
      %842 = vrot.lane.b32.xlu0 %v837, 64
      %v843 = vpop.permute.xlu0 %842
      %v846 = vadd.f32 %v834, %v841
      %v847 = vadd.f32 %v835, %v843
      %v848 = vlaneseq
      %v849 = vshrl.u32 %v848, 7
      %v850 = vadd.s32 %v849, 8
      %v851 = vlaneseq
      %v852 = vand.u32 %v851, 127
      %vm853 = vcmp.gt.s32.totalorder %v852, %v849
      %vm854 = vcmp.gt.s32.totalorder %v852, %v850
      %v855 = vld [vmem:[%s567] sm:$0x1]
      %vm856 = vcmp.gt.f32.partialorder %v855, 0.5
      %v857 = vsel %vm856, 1, 0
      %v858 = vperm.slane %v857, 0
      %vm859 = vcmp.eq.s32.totalorder %v858, 1
      %vm860 = vmor %vm853, %vm859
      %vm861 = vmor %vm854, %vm859
      %v862 = vsel %vm860, 0.0, -1e+30
      %v863 = vsel %vm861, 0.0, -1e+30
      %v864 = vpack.c.bf16 %v804, %v804
      %v865 = vpack.c.bf16 %v805, %v805
      %v866 = vpack.c.bf16 %v846, %v846
      %v867 = vpack.c.bf16 %v847, %v847
      %v868 = vpack.c.bf16 %v742, %v742
      %v869 = vpack.c.bf16 %v744, %v744
      %v870 = vld [vmem:[%s580] sm:$0xf]
      %v871 = vld [vmem:[%s580 + $0x4] sm:$0xf]
      %v872 = vld [vmem:[%s580 + $0x8] sm:$0xf]
      %v873 = vld [vmem:[%s580 + $0xc] sm:$0xf]
      %v874 = vld [vmem:[%s580 + $0x10] sm:$0xf]
      %v875 = vld [vmem:[%s580 + $0x14] sm:$0xf]
      %v876 = vld [vmem:[%s580 + $0x18] sm:$0xf]
      %v877 = vld [vmem:[%s580 + $0x1c] sm:$0xf]
      %v880 = vunpack.c.l.b16 %v864
      %v881 = vunpack.c.l.b16 %v865
      %v882 = vpack.c.b16 %v881, %v880
      %v885 = vunpack.c.l.b16 %v866
      %v886 = vunpack.c.l.b16 %v867
      %v887 = vpack.c.b16 %v886, %v885
      %888 = vrot.lane.b32.xlu0 %v887, 64
      %v889 = vpop.permute.xlu0 %888
      %vm890 = vcmask 130048
      %v892 = vsel %vm890, %v882, 0
      %v895 = vsel %vm890, %v889, 0
      %897 = vmatpush.bf16.xpose.msra.mxu0 0
      %898 = vmatpush.bf16.xpose.msra.mxu0 0
      %899 = vmatpush.bf16.xpose.msra.mxu0 0
      %900 = vmatpush.bf16.xpose.msra.mxu0 0
      %901 = vmatpush.bf16.xpose.msra.mxu0 0
      %902 = vmatpush.bf16.xpose.msra.mxu0 0
      %903 = vmatpush.bf16.xpose.msra.mxu0 0
      %904 = vmatpush.bf16.xpose.msra.mxu0 %v895
      %905 = vmatmul.bf16.gmra.mxu0 %v892
      %v906 = vpop.f32.mrf.mxu0
      %v907 = vadd.f32 %v862, %v906
      %v908 = vpop.f32.mrf.mxu0
      %v909 = vadd.f32 %v863, %v908
      %910 = vdwg.mxu0
      %v911 = vsel %vm890, %v907, -inf
      %912 = vmax.xlane.f32.xlu0 %v911
      %v913 = vpop.xlane.xlu0 %912
      %v914 = vsel %vm890, %v909, -inf
      %915 = vmax.xlane.f32.xlu0 %v914
      %v916 = vpop.xlane.xlu0 %915
      %v917 = vsub.f32 %v907, %v913
      %v918 = vsub.f32 %v909, %v916
      %v919 = vmul.f32 %v917, 1.442695
      %v920 = vpow.pop %v919
      %v921 = vmul.f32 %v918, 1.442695
      %v922 = vpow.pop %v921
      %v923 = vsel %vm890, %v920, 0.0
      %924 = vadd.xlane.f32.xlu0 %v923
      %v925 = vpop.xlane.xlu0 %924
      %v926 = vsel %vm890, %v922, 0.0
      %927 = vadd.xlane.f32.xlu0 %v926
      %v928 = vpop.xlane.xlu0 %927
      %v929 = vrcp.pop %v925
      %v930 = vrcp.pop %v928
      %v931 = vmul.f32 %v920, %v929
      %v932 = vmul.f32 %v922, %v930
      %v933 = vpack.c.bf16 %v932, %v931
      %v936 = vunpack.c.l.b16 %v868
      %v937 = vunpack.c.l.b16 %v869
      %v938 = vpack.c.b16 %v937, %v936
      %v941 = vsel %vm890, %v933, 0
      %943 = vmatpush.bf16.msra.mxu0 0
      %944 = vmatpush.bf16.msra.mxu0 0
      %945 = vmatpush.bf16.msra.mxu0 0
      %946 = vmatpush.bf16.msra.mxu0 0
      %947 = vmatpush.bf16.msra.mxu0 0
      %948 = vmatpush.bf16.msra.mxu0 0
      %949 = vmatpush.bf16.msra.mxu0 0
      %950 = vmatpush.bf16.msra.mxu0 %v938
      %951 = vmatmul.bf16.gmra.mxu0 %v941
      %v952 = vpop.f32.mrf.mxu0
      %v953 = vadd.f32 0.0, %v952
      %v954 = vpop.f32.mrf.mxu0
      %v955 = vadd.f32 0.0, %v954
      %956 = vdwg.mxu0
      %v957 = vpack.c.bf16 %v955, %v953
      %v960 = vunpack.c.l.b16 %v870
      %v961 = vunpack.c.l.b16 %v871
      %v962 = vpack.c.b16 %v961, %v960
      %v965 = vsel %vm890, %v957, 0
      %967 = vmatpush.bf16.msra.mxu0 0
      %968 = vmatpush.bf16.msra.mxu0 0
      %969 = vmatpush.bf16.msra.mxu0 0
      %970 = vmatpush.bf16.msra.mxu0 0
      %971 = vmatpush.bf16.msra.mxu0 0
      %972 = vmatpush.bf16.msra.mxu0 0
      %973 = vmatpush.bf16.msra.mxu0 0
      %974 = vmatpush.bf16.msra.mxu0 %v962
      %975 = vmatmul.bf16.gmra.mxu0 %v965
      %v976 = vpop.f32.mrf.mxu0
      %v977 = vadd.f32 0.0, %v976
      %v978 = vpop.f32.mrf.mxu0
      %v979 = vadd.f32 0.0, %v978
      %980 = vdwg.mxu0
      %v981 = vadd.f32 %v616, %v977
      %v982 = vadd.f32 %v617, %v979
      %983 = vrot.lane.b32.xlu0 %v882, 112
      %v984 = vpop.permute.xlu0 %983
      %985 = vrot.lane.b32.xlu0 %v887, 48
      %v986 = vpop.permute.xlu0 %985
      %v988 = vsel %vm890, %v984, 0
      %v991 = vsel %vm890, %v986, 0
      %993 = vmatpush.bf16.xpose.msra.mxu0 0
      %994 = vmatpush.bf16.xpose.msra.mxu0 0
      %995 = vmatpush.bf16.xpose.msra.mxu0 0
      %996 = vmatpush.bf16.xpose.msra.mxu0 0
      %997 = vmatpush.bf16.xpose.msra.mxu0 0
      %998 = vmatpush.bf16.xpose.msra.mxu0 0
      %999 = vmatpush.bf16.xpose.msra.mxu0 0
      %1000 = vmatpush.bf16.xpose.msra.mxu0 %v991
      %1001 = vmatmul.bf16.gmra.mxu0 %v988
      %v1002 = vpop.f32.mrf.mxu0
      %v1003 = vadd.f32 %v862, %v1002
      %v1004 = vpop.f32.mrf.mxu0
      %v1005 = vadd.f32 %v863, %v1004
      %1006 = vdwg.mxu0
      %v1007 = vsel %vm890, %v1003, -inf
      %1008 = vmax.xlane.f32.xlu0 %v1007
      %v1009 = vpop.xlane.xlu0 %1008
      %v1010 = vsel %vm890, %v1005, -inf
      %1011 = vmax.xlane.f32.xlu0 %v1010
      %v1012 = vpop.xlane.xlu0 %1011
      %v1013 = vsub.f32 %v1003, %v1009
      %v1014 = vsub.f32 %v1005, %v1012
      %v1015 = vmul.f32 %v1013, 1.442695
      %v1016 = vpow.pop %v1015
      %v1017 = vmul.f32 %v1014, 1.442695
      %v1018 = vpow.pop %v1017
      %v1019 = vsel %vm890, %v1016, 0.0
      %1020 = vadd.xlane.f32.xlu0 %v1019
      %v1021 = vpop.xlane.xlu0 %1020
      %v1022 = vsel %vm890, %v1018, 0.0
      %1023 = vadd.xlane.f32.xlu0 %v1022
      %v1024 = vpop.xlane.xlu0 %1023
      %v1025 = vrcp.pop %v1021
      %v1026 = vrcp.pop %v1024
      %v1027 = vmul.f32 %v1016, %v1025
      %v1028 = vmul.f32 %v1018, %v1026
      %v1029 = vpack.c.bf16 %v1028, %v1027
      %1030 = vrot.lane.b32.xlu0 %v938, 112
      %v1031 = vpop.permute.xlu0 %1030
      %v1034 = vsel %vm890, %v1029, 0
      %1036 = vmatpush.bf16.msra.mxu0 0
      %1037 = vmatpush.bf16.msra.mxu0 0
      %1038 = vmatpush.bf16.msra.mxu0 0
      %1039 = vmatpush.bf16.msra.mxu0 0
      %1040 = vmatpush.bf16.msra.mxu0 0
      %1041 = vmatpush.bf16.msra.mxu0 0
      %1042 = vmatpush.bf16.msra.mxu0 0
      %1043 = vmatpush.bf16.msra.mxu0 %v1031
      %1044 = vmatmul.bf16.gmra.mxu0 %v1034
      %v1045 = vpop.f32.mrf.mxu0
      %v1046 = vadd.f32 0.0, %v1045
      %v1047 = vpop.f32.mrf.mxu0
      %v1048 = vadd.f32 0.0, %v1047
      %1049 = vdwg.mxu0
      %v1050 = vpack.c.bf16 %v1048, %v1046
      %v1053 = vunpack.c.l.b16 %v872
      %v1054 = vunpack.c.l.b16 %v873
      %v1055 = vpack.c.b16 %v1054, %v1053
      %v1058 = vsel %vm890, %v1050, 0
      %1060 = vmatpush.bf16.msra.mxu0 0
      %1061 = vmatpush.bf16.msra.mxu0 0
      %1062 = vmatpush.bf16.msra.mxu0 0
      %1063 = vmatpush.bf16.msra.mxu0 0
      %1064 = vmatpush.bf16.msra.mxu0 0
      %1065 = vmatpush.bf16.msra.mxu0 0
      %1066 = vmatpush.bf16.msra.mxu0 0
      %1067 = vmatpush.bf16.msra.mxu0 %v1055
      %1068 = vmatmul.bf16.gmra.mxu0 %v1058
      %v1069 = vpop.f32.mrf.mxu0
      %v1070 = vadd.f32 0.0, %v1069
      %v1071 = vpop.f32.mrf.mxu0
      %v1072 = vadd.f32 0.0, %v1071
      %1073 = vdwg.mxu0
      %v1074 = vadd.f32 %v981, %v1070
      %v1075 = vadd.f32 %v982, %v1072
      %1076 = vrot.lane.b32.xlu0 %v882, 96
      %v1077 = vpop.permute.xlu0 %1076
      %1078 = vrot.lane.b32.xlu0 %v887, 32
      %v1079 = vpop.permute.xlu0 %1078
      %v1081 = vsel %vm890, %v1077, 0
      %v1084 = vsel %vm890, %v1079, 0
      %1086 = vmatpush.bf16.xpose.msra.mxu0 0
      %1087 = vmatpush.bf16.xpose.msra.mxu0 0
      %1088 = vmatpush.bf16.xpose.msra.mxu0 0
      %1089 = vmatpush.bf16.xpose.msra.mxu0 0
      %1090 = vmatpush.bf16.xpose.msra.mxu0 0
      %1091 = vmatpush.bf16.xpose.msra.mxu0 0
      %1092 = vmatpush.bf16.xpose.msra.mxu0 0
      %1093 = vmatpush.bf16.xpose.msra.mxu0 %v1084
      %1094 = vmatmul.bf16.gmra.mxu0 %v1081
      %v1095 = vpop.f32.mrf.mxu0
      %v1096 = vadd.f32 %v862, %v1095
      %v1097 = vpop.f32.mrf.mxu0
      %v1098 = vadd.f32 %v863, %v1097
      %1099 = vdwg.mxu0
      %v1100 = vsel %vm890, %v1096, -inf
      %1101 = vmax.xlane.f32.xlu0 %v1100
      %v1102 = vpop.xlane.xlu0 %1101
      %v1103 = vsel %vm890, %v1098, -inf
      %1104 = vmax.xlane.f32.xlu0 %v1103
      %v1105 = vpop.xlane.xlu0 %1104
      %v1106 = vsub.f32 %v1096, %v1102
      %v1107 = vsub.f32 %v1098, %v1105
      %v1108 = vmul.f32 %v1106, 1.442695
      %v1109 = vpow.pop %v1108
      %v1110 = vmul.f32 %v1107, 1.442695
      %v1111 = vpow.pop %v1110
      %v1112 = vsel %vm890, %v1109, 0.0
      %1113 = vadd.xlane.f32.xlu0 %v1112
      %v1114 = vpop.xlane.xlu0 %1113
      %v1115 = vsel %vm890, %v1111, 0.0
      %1116 = vadd.xlane.f32.xlu0 %v1115
      %v1117 = vpop.xlane.xlu0 %1116
      %v1118 = vrcp.pop %v1114
      %v1119 = vrcp.pop %v1117
      %v1120 = vmul.f32 %v1109, %v1118
      %v1121 = vmul.f32 %v1111, %v1119
      %v1122 = vpack.c.bf16 %v1121, %v1120
      %1123 = vrot.lane.b32.xlu0 %v938, 96
      %v1124 = vpop.permute.xlu0 %1123
      %v1127 = vsel %vm890, %v1122, 0
      %1129 = vmatpush.bf16.msra.mxu0 0
      %1130 = vmatpush.bf16.msra.mxu0 0
      %1131 = vmatpush.bf16.msra.mxu0 0
      %1132 = vmatpush.bf16.msra.mxu0 0
      %1133 = vmatpush.bf16.msra.mxu0 0
      %1134 = vmatpush.bf16.msra.mxu0 0
      %1135 = vmatpush.bf16.msra.mxu0 0
      %1136 = vmatpush.bf16.msra.mxu0 %v1124
      %1137 = vmatmul.bf16.gmra.mxu0 %v1127
      %v1138 = vpop.f32.mrf.mxu0
      %v1139 = vadd.f32 0.0, %v1138
      %v1140 = vpop.f32.mrf.mxu0
      %v1141 = vadd.f32 0.0, %v1140
      %1142 = vdwg.mxu0
      %v1143 = vpack.c.bf16 %v1141, %v1139
      %v1146 = vunpack.c.l.b16 %v874
      %v1147 = vunpack.c.l.b16 %v875
      %v1148 = vpack.c.b16 %v1147, %v1146
      %v1151 = vsel %vm890, %v1143, 0
      %1153 = vmatpush.bf16.msra.mxu0 0
      %1154 = vmatpush.bf16.msra.mxu0 0
      %1155 = vmatpush.bf16.msra.mxu0 0
      %1156 = vmatpush.bf16.msra.mxu0 0
      %1157 = vmatpush.bf16.msra.mxu0 0
      %1158 = vmatpush.bf16.msra.mxu0 0
      %1159 = vmatpush.bf16.msra.mxu0 0
      %1160 = vmatpush.bf16.msra.mxu0 %v1148
      %1161 = vmatmul.bf16.gmra.mxu0 %v1151
      %v1162 = vpop.f32.mrf.mxu0
      %v1163 = vadd.f32 0.0, %v1162
      %v1164 = vpop.f32.mrf.mxu0
      %v1165 = vadd.f32 0.0, %v1164
      %1166 = vdwg.mxu0
      %v1167 = vadd.f32 %v1074, %v1163
      %v1168 = vadd.f32 %v1075, %v1165
      %1169 = vrot.lane.b32.xlu0 %v882, 80
      %v1170 = vpop.permute.xlu0 %1169
      %1171 = vrot.lane.b32.xlu0 %v887, 16
      %v1172 = vpop.permute.xlu0 %1171
      %v1174 = vsel %vm890, %v1170, 0
      %v1177 = vsel %vm890, %v1172, 0
      %1179 = vmatpush.bf16.xpose.msra.mxu0 0
      %1180 = vmatpush.bf16.xpose.msra.mxu0 0
      %1181 = vmatpush.bf16.xpose.msra.mxu0 0
      %1182 = vmatpush.bf16.xpose.msra.mxu0 0
      %1183 = vmatpush.bf16.xpose.msra.mxu0 0
      %1184 = vmatpush.bf16.xpose.msra.mxu0 0
      %1185 = vmatpush.bf16.xpose.msra.mxu0 0
      %1186 = vmatpush.bf16.xpose.msra.mxu0 %v1177
      %1187 = vmatmul.bf16.gmra.mxu0 %v1174
      %v1188 = vpop.f32.mrf.mxu0
      %v1189 = vadd.f32 %v862, %v1188
      %v1190 = vpop.f32.mrf.mxu0
      %v1191 = vadd.f32 %v863, %v1190
      %1192 = vdwg.mxu0
      %v1193 = vsel %vm890, %v1189, -inf
      %1194 = vmax.xlane.f32.xlu0 %v1193
      %v1195 = vpop.xlane.xlu0 %1194
      %v1196 = vsel %vm890, %v1191, -inf
      %1197 = vmax.xlane.f32.xlu0 %v1196
      %v1198 = vpop.xlane.xlu0 %1197
      %v1199 = vsub.f32 %v1189, %v1195
      %v1200 = vsub.f32 %v1191, %v1198
      %v1201 = vmul.f32 %v1199, 1.442695
      %v1202 = vpow.pop %v1201
      %v1203 = vmul.f32 %v1200, 1.442695
      %v1204 = vpow.pop %v1203
      %v1205 = vsel %vm890, %v1202, 0.0
      %1206 = vadd.xlane.f32.xlu0 %v1205
      %v1207 = vpop.xlane.xlu0 %1206
      %v1208 = vsel %vm890, %v1204, 0.0
      %1209 = vadd.xlane.f32.xlu0 %v1208
      %v1210 = vpop.xlane.xlu0 %1209
      %v1211 = vrcp.pop %v1207
      %v1212 = vrcp.pop %v1210
      %v1213 = vmul.f32 %v1202, %v1211
      %v1214 = vmul.f32 %v1204, %v1212
      %v1215 = vpack.c.bf16 %v1214, %v1213
      %1216 = vrot.lane.b32.xlu0 %v938, 80
      %v1217 = vpop.permute.xlu0 %1216
      %v1220 = vsel %vm890, %v1215, 0
      %1222 = vmatpush.bf16.msra.mxu0 0
      %1223 = vmatpush.bf16.msra.mxu0 0
      %1224 = vmatpush.bf16.msra.mxu0 0
      %1225 = vmatpush.bf16.msra.mxu0 0
      %1226 = vmatpush.bf16.msra.mxu0 0
      %1227 = vmatpush.bf16.msra.mxu0 0
      %1228 = vmatpush.bf16.msra.mxu0 0
      %1229 = vmatpush.bf16.msra.mxu0 %v1217
      %1230 = vmatmul.bf16.gmra.mxu0 %v1220
      %v1231 = vpop.f32.mrf.mxu0
      %v1232 = vadd.f32 0.0, %v1231
      %v1233 = vpop.f32.mrf.mxu0
      %v1234 = vadd.f32 0.0, %v1233
      %1235 = vdwg.mxu0
      %v1236 = vpack.c.bf16 %v1234, %v1232
      %v1239 = vunpack.c.l.b16 %v876
      %v1240 = vunpack.c.l.b16 %v877
      %v1241 = vpack.c.b16 %v1240, %v1239
      %v1244 = vsel %vm890, %v1236, 0
      %1246 = vmatpush.bf16.msra.mxu0 0
      %1247 = vmatpush.bf16.msra.mxu0 0
      %1248 = vmatpush.bf16.msra.mxu0 0
      %1249 = vmatpush.bf16.msra.mxu0 0
      %1250 = vmatpush.bf16.msra.mxu0 0
      %1251 = vmatpush.bf16.msra.mxu0 0
      %1252 = vmatpush.bf16.msra.mxu0 0
      %1253 = vmatpush.bf16.msra.mxu0 %v1241
      %1254 = vmatmul.bf16.gmra.mxu0 %v1244
      %v1255 = vpop.f32.mrf.mxu0
      %v1256 = vadd.f32 0.0, %v1255
      %v1257 = vpop.f32.mrf.mxu0
      %v1258 = vadd.f32 0.0, %v1257
      %1259 = vdwg.mxu0
      %v1260 = vadd.f32 %v1167, %v1256
      %v1261 = vadd.f32 %v1168, %v1258
      %v1262 = vld [vmem:[%s583] sm:$0x1]
      %v1263 = vmul.f32 %v1260, %v1260
      %v1264 = vmul.f32 %v1261, %v1261
      %v1265 = vsel %vm621, %v1263, 0.0
      %1266 = vadd.xlane.f32.xlu0 %v1265
      %v1267 = vpop.xlane.xlu0 %1266
      %v1268 = vsel %vm621, %v1264, 0.0
      %1269 = vadd.xlane.f32.xlu0 %v1268
      %v1270 = vpop.xlane.xlu0 %1269
      %v1271 = vmul.f32 %v1267, %v634
      %v1272 = vmul.f32 %v1270, %v634
      %v1273 = vadd.f32 %v1271, 0.0001
      %v1274 = vadd.f32 %v1272, 0.0001
      %v1275 = vrsqrt.pop %v1273
      %v1276 = vmul.f32 %v1275, %v1273
      %v1277 = vmul.f32 %v1276, %v1275
      %v1278 = vmul.f32 0.5, %v1277
      %v1279 = vsub.f32 1.5, %v1278
      %v1280 = vmul.f32 %v1275, %v1279
      %vm1281 = vweird.f32 %v1273
      %vm1282 = vweird.f32 %v1275
      %vm1283 = vmor %vm1281, %vm1282
      %v1284 = vsel %vm1283, %v1275, %v1280
      %v1285 = vrsqrt.pop %v1274
      %v1286 = vmul.f32 %v1285, %v1274
      %v1287 = vmul.f32 %v1286, %v1285
      %v1288 = vmul.f32 0.5, %v1287
      %v1289 = vsub.f32 1.5, %v1288
      %v1290 = vmul.f32 %v1285, %v1289
      %vm1291 = vweird.f32 %v1274
      %vm1292 = vweird.f32 %v1285
      %vm1293 = vmor %vm1291, %vm1292
      %v1294 = vsel %vm1293, %v1285, %v1290
      %v1296 = vperm.slane %v1262, 0
      %v1298 = vmul.f32 %v1296, %v1284
      %v1299 = vmul.f32 %v1296, %v1294
      %v1300 = vmul.f32 %v1260, %v1298
      %v1301 = vmul.f32 %v1261, %v1299
      %v1302 = vpack.c.bf16 %v1301, %v1300
      %v1303 = vld [vmem:[%s588] sm:$0xff]
      %v1304 = vld [vmem:[%s588 + $0x8] sm:$0xff]
      %v1305 = vld [vmem:[%s588 + $0x10] sm:$0xff]
      %v1306 = vld [vmem:[%s588 + $0x18] sm:$0xff]
      %v1307 = vld [vmem:[%s588 + $0x20] sm:$0xff]
      %v1308 = vld [vmem:[%s588 + $0x28] sm:$0xff]
      %v1309 = vld [vmem:[%s588 + $0x30] sm:$0xff]
      %v1310 = vld [vmem:[%s588 + $0x38] sm:$0xff]
      %v1311 = vld [vmem:[%s592] sm:$0x3]
      %v1313 = vperm.slane %v1311, 0
      %v1314 = vperm.slane %v1311, 1
      %v1325 = vunpack.c.l.b16 %v1303
      %v1326 = vunpack.c.h.b16 %v1303
      %v1327 = vunpack.c.l.b16 %v1304
      %v1328 = vunpack.c.h.b16 %v1304
      %v1329 = vunpack.c.l.b16 %v1305
      %v1330 = vunpack.c.h.b16 %v1305
      %v1331 = vunpack.c.l.b16 %v1306
      %v1332 = vunpack.c.h.b16 %v1306
      %v1333 = vunpack.c.l.b16 %v1307
      %v1334 = vunpack.c.h.b16 %v1307
      %v1335 = vunpack.c.l.b16 %v1308
      %v1336 = vunpack.c.h.b16 %v1308
      %v1337 = vunpack.c.l.b16 %v1309
      %v1338 = vunpack.c.h.b16 %v1309
      %v1339 = vunpack.c.l.b16 %v1310
      %v1340 = vunpack.c.h.b16 %v1310
      %v1341 = vpack.c.b16 %v1327, %v1325
      %v1342 = vpack.c.b16 %v1328, %v1326
      %v1343 = vpack.c.b16 %v1331, %v1329
      %v1344 = vpack.c.b16 %v1332, %v1330
      %v1345 = vpack.c.b16 %v1335, %v1333
      %v1346 = vpack.c.b16 %v1336, %v1334
      %v1347 = vpack.c.b16 %v1339, %v1337
      %v1348 = vpack.c.b16 %v1340, %v1338
      %v1358 = vsel %vm621, %v1302, 0
      %1360 = vmatpush.bf16.msra.mxu0 0
      %1361 = vmatpush.bf16.msra.mxu0 0
      %1362 = vmatpush.bf16.msra.mxu0 0
      %1363 = vmatpush.bf16.msra.mxu0 0
      %1364 = vmatpush.bf16.msra.mxu0 %v1347
      %1365 = vmatpush.bf16.msra.mxu0 %v1345
      %1366 = vmatpush.bf16.msra.mxu0 %v1343
      %1367 = vmatpush.bf16.msra.mxu0 %v1341
      %1368 = vmatmul.bf16.gmra.mxu0 %v1358
      %v1369 = vpop.f32.mrf.mxu0
      %v1370 = vadd.f32 %v1313, %v1369
      %v1371 = vpop.f32.mrf.mxu0
      %v1372 = vadd.f32 %v1313, %v1371
      %1373 = vdwg.mxu0
      %1374 = vmatpush.bf16.msra.mxu0 0
      %1375 = vmatpush.bf16.msra.mxu0 0
      %1376 = vmatpush.bf16.msra.mxu0 0
      %1377 = vmatpush.bf16.msra.mxu0 0
      %1378 = vmatpush.bf16.msra.mxu0 %v1348
      %1379 = vmatpush.bf16.msra.mxu0 %v1346
      %1380 = vmatpush.bf16.msra.mxu0 %v1344
      %1381 = vmatpush.bf16.msra.mxu0 %v1342
      %1382 = vmatmul.bf16.gmra.mxu0 %v1358
      %v1383 = vpop.f32.mrf.mxu0
      %v1384 = vadd.f32 %v1314, %v1383
      %v1385 = vpop.f32.mrf.mxu0
      %v1386 = vadd.f32 %v1314, %v1385
      %1387 = vdwg.mxu0
      %v1388 = vsub.f32 0.0, %v1370
      %v1389 = vsub.f32 0.0, %v1372
      %v1390 = vmul.f32 %v1388, 1.442695
      %v1391 = vpow.pop %v1390
      %v1392 = vmul.f32 %v1389, 1.442695
      %v1393 = vpow.pop %v1392
      %v1394 = vadd.f32 %v1391, 1.0
      %v1395 = vadd.f32 %v1393, 1.0
      %v1396 = vrcp.pop %v1394
      %v1397 = vmul.f32 %v1394, %v1396
      %v1398 = vsub.f32 1.0, %v1397
      %v1399 = vmul.f32 %v1396, %v1398
      %v1400 = vadd.f32 %v1396, %v1399
      %vm1401 = vweird.f32 %v1394
      %vm1402 = vweird.f32 %v1396
      %vm1403 = vmor %vm1401, %vm1402
      %v1404 = vsel %vm1403, %v1396, %v1400
      %v1405 = vand.u32 2147483647, %v1394
      %vm1406 = vcmp.eq.f32.partialorder %v1405, 8.507059e+37
      %v1407 = vand.u32 %v1394, 2147483648
      %v1408 = vor.u32 1.1754944e-38, %v1407
      %v1409 = vsel %vm1406, %v1408, %v1404
      %v1410 = vmul.f32 1.0, %v1409
      %v1411 = vrcp.pop %v1395
      %v1412 = vmul.f32 %v1395, %v1411
      %v1413 = vsub.f32 1.0, %v1412
      %v1414 = vmul.f32 %v1411, %v1413
      %v1415 = vadd.f32 %v1411, %v1414
      %vm1416 = vweird.f32 %v1395
      %vm1417 = vweird.f32 %v1411
      %vm1418 = vmor %vm1416, %vm1417
      %v1419 = vsel %vm1418, %v1411, %v1415
      %v1420 = vand.u32 2147483647, %v1395
      %vm1421 = vcmp.eq.f32.partialorder %v1420, 8.507059e+37
      %v1422 = vand.u32 %v1395, 2147483648
      %v1423 = vor.u32 1.1754944e-38, %v1422
      %v1424 = vsel %vm1421, %v1423, %v1419
      %v1425 = vmul.f32 1.0, %v1424
      %v1426 = vmul.f32 %v1370, %v1410
      %v1427 = vmul.f32 %v1372, %v1425
      %v1428 = vmul.f32 %v1426, %v1384
      %v1429 = vmul.f32 %v1427, %v1386
      %v1430 = vpack.c.bf16 %v1429, %v1428
      %v1431 = vld [vmem:[%s597] sm:$0xf]
      %v1432 = vld [vmem:[%s597 + $0x4] sm:$0xf]
      %v1433 = vld [vmem:[%s597 + $0x8] sm:$0xf]
      %v1434 = vld [vmem:[%s597 + $0xc] sm:$0xf]
      %v1435 = vld [vmem:[%s597 + $0x10] sm:$0xf]
      %v1436 = vld [vmem:[%s597 + $0x14] sm:$0xf]
      %v1437 = vld [vmem:[%s597 + $0x18] sm:$0xf]
      %v1438 = vld [vmem:[%s597 + $0x1c] sm:$0xf]
      %v1439 = vld [vmem:[%s597 + $0x20] sm:$0xf]
      %v1440 = vld [vmem:[%s597 + $0x24] sm:$0xf]
      %v1441 = vld [vmem:[%s597 + $0x28] sm:$0xf]
      %v1442 = vld [vmem:[%s597 + $0x2c] sm:$0xf]
      %v1443 = vld [vmem:[%s597 + $0x30] sm:$0xf]
      %v1444 = vld [vmem:[%s597 + $0x34] sm:$0xf]
      %v1445 = vld [vmem:[%s597 + $0x38] sm:$0xf]
      %v1446 = vld [vmem:[%s597 + $0x3c] sm:$0xf]
      %v1447 = vld [vmem:[%s600] sm:$0x1]
      %v1449 = vperm.slane %v1447, 0
      %v1467 = vunpack.c.l.b16 %v1431
      %v1468 = vunpack.c.l.b16 %v1432
      %v1469 = vunpack.c.l.b16 %v1433
      %v1470 = vunpack.c.l.b16 %v1434
      %v1471 = vunpack.c.l.b16 %v1435
      %v1472 = vunpack.c.l.b16 %v1436
      %v1473 = vunpack.c.l.b16 %v1437
      %v1474 = vunpack.c.l.b16 %v1438
      %v1475 = vunpack.c.l.b16 %v1439
      %v1476 = vunpack.c.l.b16 %v1440
      %v1477 = vunpack.c.l.b16 %v1441
      %v1478 = vunpack.c.l.b16 %v1442
      %v1479 = vunpack.c.l.b16 %v1443
      %v1480 = vunpack.c.l.b16 %v1444
      %v1481 = vunpack.c.l.b16 %v1445
      %v1482 = vunpack.c.l.b16 %v1446
      %v1483 = vpack.c.b16 %v1468, %v1467
      %v1484 = vpack.c.b16 %v1470, %v1469
      %v1485 = vpack.c.b16 %v1472, %v1471
      %v1486 = vpack.c.b16 %v1474, %v1473
      %v1487 = vpack.c.b16 %v1476, %v1475
      %v1488 = vpack.c.b16 %v1478, %v1477
      %v1489 = vpack.c.b16 %v1480, %v1479
      %v1490 = vpack.c.b16 %v1482, %v1481
      %1499 = vmatpush.bf16.msra.mxu0 %v1490
      %1500 = vmatpush.bf16.msra.mxu0 %v1489
      %1501 = vmatpush.bf16.msra.mxu0 %v1488
      %1502 = vmatpush.bf16.msra.mxu0 %v1487
      %1503 = vmatpush.bf16.msra.mxu0 %v1486
      %1504 = vmatpush.bf16.msra.mxu0 %v1485
      %1505 = vmatpush.bf16.msra.mxu0 %v1484
      %1506 = vmatpush.bf16.msra.mxu0 %v1483
      %1507 = vmatmul.bf16.gmra.mxu0 %v1430
      %v1508 = vpop.f32.mrf.mxu0
      %v1509 = vadd.f32 %v1449, %v1508
      %v1510 = vpop.f32.mrf.mxu0
      %v1511 = vadd.f32 %v1449, %v1510
      %1512 = vdwg.mxu0
      %v1513 = vadd.f32 %v1260, %v1509
      %v1514 = vadd.f32 %v1261, %v1511
      %1515 = vst.msk [vmem:[%s605] sm:$0xff] %vm621, %v1513
      %1516 = vst.msk [vmem:[%s605 + $0x8] sm:$0xff] %vm621, %v1514
      %p1517 = scmp.lt.s32.totalorder %s28, 1
      %s1518 = scalar_select %p1517, %s28, 1
      %s1519 = smul.addr %s1518, 2
      %s1520 = smul.addr %s1519, 8
      %s1521 = scalar_lea.vmem %s13, %s1520
      // Predicated region
      $region77: #{modern_transformer_lm_forward.2} parent=71 // pred_check
        %p1522 = pneg %p377
      $region78: #{modern_transformer_lm_forward.2} parent=71 // pred_check_branch
        %1524 = sbr.rel (%p1522) target = $region80
      $region79: #{modern_transformer_lm_forward.2} parent=71 // pred_region
        _
      $region80: #{modern_transformer_lm_forward.2} parent=71 // pred_fallthru
        _
    $region72: #{modern_transformer_lm_forward.2} parent=5 // pred_fallthru
      _
    %p1525 = scmp.le.s32.totalorder 2, %s19
    // Predicated region
    $region81: #{modern_transformer_lm_forward.2} parent=5 // pred_check
      %p1526 = pneg %p1525
    $region82: #{modern_transformer_lm_forward.2} parent=5 // pred_check_branch
      %1528 = sbr.rel (%p1526) target = $region84
    $region83: #{modern_transformer_lm_forward.2} parent=5 // pred_region
      %s1529 = ssub.s32 %s19, 2
      // Predicated region
      $region85: #{modern_transformer_lm_forward.2} parent=83 // pred_check
        %p1530 = pneg %p383
      $region86: #{modern_transformer_lm_forward.2} parent=83 // pred_check_branch
        %1532 = sbr.rel (%p1530) target = $region88
      $region87: #{modern_transformer_lm_forward.2} parent=83 // pred_region
        %p1533 = scmp.lt.s32.totalorder %s30, 1
        %s1534 = scalar_select %p1533, %s30, 1
        %s1535 = smul.addr %s1534, 2
        %s1536 = smul.addr %s1535, 8
        %s1537 = scalar_lea.vmem %s13, %s1536
      $region88: #{modern_transformer_lm_forward.2} parent=83 // pred_fallthru
        _
    $region84: #{modern_transformer_lm_forward.2} parent=5 // pred_fallthru
      _
  $region6: #{modern_transformer_lm_forward.2} parent=0 // loop_footer
    %s23 = sadd.s32 1, %s19
  $region7: #{modern_transformer_lm_forward.2} parent=0 // loop_footer_branch
    %18 = sbr.rel target = $region3
  $region8: #{modern_transformer_lm_forward.2} parent=0 // loop_exit
    _

</llo_original>
